<compile_context>
chip_gen: v7x
topology: tpu7x:2x2x1
jax: 0.10.0
libtpu: 0.0.40
codegen_flags: <defaults>
</compile_context>

<pallas_src>
import functools

import jax
import jax.numpy as jnp
from jax.experimental import pallas as pl
from jax.experimental.pallas import tpu as pltpu

EPS = 1e-5
NEG_SLOPE = 0.1


# --------------------------------------------------------------------------
# Helpers: per-generation VMEM budget and strip sizing
# --------------------------------------------------------------------------
def _vmem_limit_bytes():
    """~3/4 of physical VMEM: ~96 MiB on v5e/v6e (128 MiB), ~48 MiB on v7x (64 MiB)."""
    cap = 64 * 1024 * 1024  # conservative fallback (v7x physical size)
    try:
        cap = int(pltpu.get_tpu_info().vmem_capacity_bytes)
    except Exception:
        pass
    return min(max(cap * 3 // 4, 32 * 1024 * 1024), 112 * 1024 * 1024)


def _pick_strip_height(H, W, C, budget_bytes):
    """Largest divisor of H whose estimated pass-2 per-strip VMEM footprint fits.

    Rough estimate: double-buffered bf16 y1/y2 blocks + bf16 padded/im2col
    slabs + f32 matmul result/temporaries ~= 22 * W * C bytes per strip row.
    """
    per_row = 22 * W * C
    best = 1
    for th in range(1, H + 1):
        if H % th == 0 and th * per_row <= budget_bytes:
            best = th
    return best


def _fold_bn(sum_c, ssq_c, count, gamma, beta):
    """Fold batch mean/var (biased, training-mode forward) + affine into scale/bias.

    Note: single-pass E[x^2]-mean^2 can lose precision for |mean| >> std; the
    clamp keeps it safe, and activations here are zero-ish mean conv outputs.
    """
    mean = sum_c / count
    var = jnp.maximum(ssq_c / count - mean * mean, 0.0)
    scale = gamma / jnp.sqrt(var + EPS)
    bias = beta - mean * scale
    return scale.astype(jnp.float32), bias.astype(jnp.float32)


# --------------------------------------------------------------------------
# Pass 1: 1x1 conv (matmul over strip pixels) + BN1 partial statistics
# --------------------------------------------------------------------------
def _conv1_stats_kernel(x_ref, w1_ref, y1_ref, sum_ref, ssq_ref):
    TH, W, C = x_ref.shape
    Ch = w1_ref.shape[1]
    x = x_ref[...].reshape(TH * W, C)                         # bf16 MXU operand
    y = jnp.dot(x, w1_ref[...], preferred_element_type=jnp.float32)
    y1_ref[...] = y.reshape(TH, W, Ch).astype(jnp.bfloat16)   # bf16 intermediate
    # single-pass BN statistics (sum, sum of squares) in f32; broadcast to 8
    # sublanes so the stats block satisfies the (8, lane) tiling constraint.
    sum_ref[...] = jnp.broadcast_to(jnp.sum(y, axis=0).reshape(1, Ch), (8, Ch))
    ssq_ref[...] = jnp.broadcast_to(jnp.sum(y * y, axis=0).reshape(1, Ch), (8, Ch))


# --------------------------------------------------------------------------
# Pass 2: BN1-apply + LeakyReLU + 3x3 SAME conv (im2col) + BN2 partial stats
# --------------------------------------------------------------------------
def _conv2_stats_kernel(y1_ref, top_ref, bot_ref, s1_ref, b1_ref, w2_ref,
                        y2_ref, sum_ref, ssq_ref, pad_ref):
    TH, W, Ch = y1_ref.shape
    C = w2_ref.shape[1]
    h = pl.program_id(1)
    n_strips = pl.num_programs(1)

    scale = s1_ref[...].reshape(1, 1, Ch)
    shift = b1_ref[...].reshape(1, 1, Ch)

    def bn1_lrelu(v):
        a = v.astype(jnp.float32) * scale + shift
        return jnp.where(a > 0, a, NEG_SLOPE * a)

    a1 = bn1_lrelu(y1_ref[...])                                    # (TH, W, Ch) f32
    # Halo rows: BN+LReLU, then zero at the image boundary (SAME zero padding).
    top = bn1_lrelu(top_ref[...]) * (h > 0).astype(jnp.float32)
    bot = bn1_lrelu(bot_ref[...]) * (h < n_strips - 1).astype(jnp.float32)

    # Assemble the zero-padded bf16 slab.  Only the 1-pixel halo columns are
    # memset; rows come from the strip / halo loads (interior fully rewritten
    # every step, so per-core scratch reuse is safe).
    zcol = jnp.zeros((TH + 2, 1, Ch), jnp.bfloat16)
    pad_ref[:, 0:1, :] = zcol
    pad_ref[:, W + 1:W + 2, :] = zcol
    pad_ref[0:1, 1:W + 1, :] = top.astype(jnp.bfloat16)
    pad_ref[TH + 1:TH + 2, 1:W + 1, :] = bot.astype(jnp.bfloat16)
    pad_ref[1:TH + 1, 1:W + 1, :] = a1.astype(jnp.bfloat16)

    # im2col: one (TH*W, 9*Ch) bf16 slab, K ordered (dy, dx, ch) to match the
    # HWIO weights reshaped to (9*Ch, C).  Single MXU matmul, f32 accumulation.
    taps = []
    for k in range(9):
        dy, dx = divmod(k, 3)
        taps.append(pad_ref[dy:dy + TH, dx:dx + W, :])
    slab = jnp.concatenate(taps, axis=-1).reshape(TH * W, 9 * Ch)
    y = jnp.dot(slab, w2_ref[...], preferred_element_type=jnp.float32)

    y2_ref[...] = y.reshape(TH, W, C).astype(jnp.bfloat16)
    sum_ref[...] = jnp.broadcast_to(jnp.sum(y, axis=0).reshape(1, C), (8, C))
    ssq_ref[...] = jnp.broadcast_to(jnp.sum(y * y, axis=0).reshape(1, C), (8, C))


# --------------------------------------------------------------------------
# Pass 3: BN2-apply + LeakyReLU + residual add (pure elementwise)
# --------------------------------------------------------------------------
def _bn2_residual_kernel(y2_ref, x_ref, s2_ref, b2_ref, o_ref):
    C = y2_ref.shape[-1]
    a = y2_ref[...].astype(jnp.float32) * s2_ref[...].reshape(1, 1, C) \
        + b2_ref[...].reshape(1, 1, C)
    a = jnp.where(a > 0, a, NEG_SLOPE * a)
    o_ref[...] = (a + x_ref[...].astype(jnp.float32)).astype(o_ref.dtype)


# --------------------------------------------------------------------------
# Wrappers
# --------------------------------------------------------------------------
def resblock_pallas_nhwc(x_nhwc, w1, g1, b1, w2, g2, b2, *, strip_rows=None):
    """x_nhwc: (N, H, W, C).  w1: (C, C//2).  w2: (3, 3, C//2, C) HWIO."""
    N, H, W, C = x_nhwc.shape
    Ch = w1.shape[1]
    assert C == 2 * Ch
    R = N * H * W

    vmem_limit = _vmem_limit_bytes()
    strip_budget = min(8 << 20, max(2 << 20, vmem_limit // 12))
    TH = _pick_strip_height(H, W, C, strip_budget) if strip_rows is None else strip_rows
    assert H % TH == 0, "strip_rows must divide H"
    S = H // TH

    cparams = pltpu.CompilerParams(
        dimension_semantics=("parallel", "parallel"),
        vmem_limit_bytes=vmem_limit)

    # bf16 MXU operands; the x cast is free in a model whose activations are
    # already bf16 (pass bf16 x directly in that case).
    x_bf = x_nhwc.astype(jnp.bfloat16)
    w1_bf = w1.astype(jnp.bfloat16)
    w2_bf = w2.reshape(9 * Ch, C).astype(jnp.bfloat16)   # K ordered (dy, dx, ch)

    # ---- pass 1: 1x1 conv + BN1 partial statistics -------------------------
    y1, s1p, q1p = pl.pallas_call(
        _conv1_stats_kernel,
        grid=(N, S),
        in_specs=[pl.BlockSpec((None, TH, W, C), lambda n, h: (n, h, 0, 0)),
                  pl.BlockSpec((C, Ch), lambda n, h: (0, 0))],
        out_specs=[pl.BlockSpec((None, TH, W, Ch), lambda n, h: (n, h, 0, 0)),
                   pl.BlockSpec((None, None, 8, Ch), lambda n, h: (n, h, 0, 0)),
                   pl.BlockSpec((None, None, 8, Ch), lambda n, h: (n, h, 0, 0))],
        out_shape=(jax.ShapeDtypeStruct((N, H, W, Ch), jnp.bfloat16),
                   jax.ShapeDtypeStruct((N, S, 8, Ch), jnp.float32),
                   jax.ShapeDtypeStruct((N, S, 8, Ch), jnp.float32)),
        compiler_params=cparams,
        cost_estimate=pl.CostEstimate(
            flops=2 * R * C * Ch, transcendentals=0,
            bytes_accessed=R * C * 2 + R * Ch * 2 + C * Ch * 2),
    )(x_bf, w1_bf)

    scale1, bias1 = _fold_bn(jnp.sum(s1p[:, :, 0, :], axis=(0, 1)),
                             jnp.sum(q1p[:, :, 0, :], axis=(0, 1)), R, g1, b1)

    # ---- pass 2: BN1-apply + LReLU + 3x3 conv (im2col) + BN2 stats ---------
    y2, s2p, q2p = pl.pallas_call(
        _conv2_stats_kernel,
        grid=(N, S),
        in_specs=[
            pl.BlockSpec((None, TH, W, Ch), lambda n, h: (n, h, 0, 0)),
            # 1-row halos: block size 1 on H => the index map returns the row
            # index itself, clamped at the image boundary (kernel zeroes the
            # boundary rows, giving SAME zero padding).
            pl.BlockSpec((None, 1, W, Ch),
                         lambda n, h: (n, jnp.maximum(h * TH - 1, 0), 0, 0)),
            pl.BlockSpec((None, 1, W, Ch),
                         lambda n, h: (n, jnp.minimum(h * TH + TH, H - 1), 0, 0)),
            pl.BlockSpec((1, Ch), lambda n, h: (0, 0)),
            pl.BlockSpec((1, Ch), lambda n, h: (0, 0)),
            pl.BlockSpec((9 * Ch, C), lambda n, h: (0, 0)),
        ],
        out_specs=[pl.BlockSpec((None, TH, W, C), lambda n, h: (n, h, 0, 0)),
                   pl.BlockSpec((None, None, 8, C), lambda n, h: (n, h, 0, 0)),
                   pl.BlockSpec((None, None, 8, C), lambda n, h: (n, h, 0, 0))],
        out_shape=(jax.ShapeDtypeStruct((N, H, W, C), jnp.bfloat16),
                   jax.ShapeDtypeStruct((N, S, 8, C), jnp.float32),
                   jax.ShapeDtypeStruct((N, S, 8, C), jnp.float32)),
        scratch_shapes=[pltpu.VMEM((TH + 2, W + 2, Ch), jnp.bfloat16)],
        compiler_params=cparams,
        cost_estimate=pl.CostEstimate(
            flops=2 * R * 9 * Ch * C + 8 * R * Ch, transcendentals=0,
            bytes_accessed=3 * R * Ch * 2 + R * C * 2 + 9 * Ch * C * 2),
    )(y1, y1, y1, scale1.reshape(1, Ch), bias1.reshape(1, Ch), w2_bf)

    scale2, bias2 = _fold_bn(jnp.sum(s2p[:, :, 0, :], axis=(0, 1)),
                             jnp.sum(q2p[:, :, 0, :], axis=(0, 1)), R, g2, b2)

    # ---- pass 3: BN2-apply + LReLU + residual add ---------------------------
    out = pl.pallas_call(
        _bn2_residual_kernel,
        grid=(N, S),
        in_specs=[pl.BlockSpec((None, TH, W, C), lambda n, h: (n, h, 0, 0)),
                  pl.BlockSpec((None, TH, W, C), lambda n, h: (n, h, 0, 0)),
                  pl.BlockSpec((1, C), lambda n, h: (0, 0)),
                  pl.BlockSpec((1, C), lambda n, h: (0, 0))],
        out_specs=pl.BlockSpec((None, TH, W, C), lambda n, h: (n, h, 0, 0)),
        out_shape=jax.ShapeDtypeStruct((N, H, W, C), x_nhwc.dtype),
        compiler_params=cparams,
        cost_estimate=pl.CostEstimate(
            flops=5 * R * C, transcendentals=0,
            bytes_accessed=R * C * (2 + 4 + 4)),
    )(y2, x_nhwc, scale2.reshape(1, C), bias2.reshape(1, C))
    return out


def resblock_pallas(x_nchw, w1, g1, b1, w2, g2, b2, *, strip_rows=None):
    """NCHW wrapper matching the PyTorch module's layout.

    Weight layouts expected here (a real PyTorch port must convert):
      w1: (C_in, C_out)       == conv1.weight[:, :, 0, 0].T
      w2: (3, 3, C_in, C_out) == conv2.weight.permute(2, 3, 1, 0)  (HWIO)
    An NHWC model should call resblock_pallas_nhwc directly (no transposes).
    """
    x_nhwc = jnp.transpose(x_nchw, (0, 2, 3, 1))
    out = resblock_pallas_nhwc(x_nhwc, w1, g1, b1, w2, g2, b2,
                               strip_rows=strip_rows)
    return jnp.transpose(out, (0, 3, 1, 2))


# --------------------------------------------------------------------------
# Pure-JAX reference (f32 everywhere) for the correctness check
# --------------------------------------------------------------------------
def resblock_reference(x_nchw, w1, g1, b1, w2, g2, b2):
    x = jnp.transpose(x_nchw, (0, 2, 3, 1))

    def bn_lrelu(y, g, b):
        mean = jnp.mean(y, axis=(0, 1, 2), keepdims=True)
        var = jnp.mean((y - mean) ** 2, axis=(0, 1, 2), keepdims=True)
        yn = (y - mean) / jnp.sqrt(var + EPS) * g.reshape(1, 1, 1, -1) \
             + b.reshape(1, 1, 1, -1)
        return jnp.where(yn > 0, yn, NEG_SLOPE * yn)

    dn = ('NHWC', 'HWIO', 'NHWC')
    y1 = jax.lax.conv_general_dilated(x, w1.reshape(1, 1, *w1.shape),
                                      (1, 1), 'SAME', dimension_numbers=dn)
    a1 = bn_lrelu(y1, g1, b1)
    y2 = jax.lax.conv_general_dilated(a1, w2, (1, 1), 'SAME',
                                      dimension_numbers=dn)
    a2 = bn_lrelu(y2, g2, b2)
    return jnp.transpose(a2 + x, (0, 3, 1, 2))


if __name__ == "__main__":
    N, C, H, W = 2, 8, 16, 16
    Ch = C // 2

    key = jax.random.PRNGKey(0)
    kx, kw1, kw2, kg1, kb1, kg2, kb2 = jax.random.split(key, 7)

    x = jax.random.normal(kx, (N, C, H, W), jnp.float32)

    # Deterministic synthetic parameters (shapes follow the nn.Module __init__).
    w1 = 0.2 * jax.random.normal(kw1, (C, Ch), jnp.float32)        # 1x1 conv, (Cin, Cout)
    w2 = 0.1 * jax.random.normal(kw2, (3, 3, Ch, C), jnp.float32)  # 3x3 conv, HWIO
    g1 = 1.0 + 0.1 * jax.random.normal(kg1, (Ch,), jnp.float32)    # BN1 gamma
    b1 = 0.1 * jax.random.normal(kb1, (Ch,), jnp.float32)          # BN1 beta
    g2 = 1.0 + 0.1 * jax.random.normal(kg2, (C,), jnp.float32)     # BN2 gamma
    b2 = 0.1 * jax.random.normal(kb2, (C,), jnp.float32)           # BN2 beta

    # strip_rows=4 -> 4 H-strips per image (grid (2, 4)), exercising the halo
    # exchange + pipelined path; production sizes pick the strip automatically
    # from the per-generation VMEM budget.
    run = jax.jit(functools.partial(resblock_pallas, strip_rows=4))
    out = jax.block_until_ready(run(x, w1, g1, b1, w2, g2, b2))

    ref = resblock_reference(x, w1, g1, b1, w2, g2, b2)
    assert out.shape == (N, C, H, W)
    # Tolerance accounts for the intentional bf16 MXU operands / bf16
    # intermediates (the reference is pure f32); structural errors are O(0.5+).
    err = jnp.max(jnp.abs(out - ref))
    assert jnp.allclose(out, ref, atol=5e-2, rtol=5e-2), f"max abs err {err}"

    print("KERNEL_OK")
</pallas_src>

<mosaic_0001>
module attributes {stable_mosaic.version = 11 : i64} {
  func.func @_conv1_stats_kernel(%arg0: i32, %arg1: i32, %arg2: memref<1x4x16x8xbf16, #tpu.memory_space<vmem>>, %arg3: memref<8x4xbf16, #tpu.memory_space<vmem>>, %arg4: memref<1x4x16x4xbf16, #tpu.memory_space<vmem>>, %arg5: memref<1x1x8x4xf32, #tpu.memory_space<vmem>>, %arg6: memref<1x1x8x4xf32, #tpu.memory_space<vmem>>) attributes {dimension_semantics = [#tpu.dimension_semantics<parallel>, #tpu.dimension_semantics<parallel>], iteration_bounds = array<i64: 2, 4>, scalar_prefetch = 0 : i64, scratch_operands = 0 : i64, tpu.core_type = #tpu.core_type<tc>, window_params = [{transform_indices = @transform_0, window_bounds = array<i64: 1, 4, 16, 8>}, {pipeline_mode = #tpu.pipeline_mode<synchronous>, transform_indices = @transform_1, window_bounds = array<i64: 8, 4>}, {transform_indices = @transform_2, window_bounds = array<i64: 1, 4, 16, 4>}, {transform_indices = @transform_3, window_bounds = array<i64: 1, 1, 8, 4>}, {transform_indices = @transform_4, window_bounds = array<i64: 1, 1, 8, 4>}]} {
    %c0 = arith.constant 0 : index
    %c0_0 = arith.constant 0 : index
    %c0_1 = arith.constant 0 : index
    %c0_2 = arith.constant 0 : index
    %0 = vector.load %arg2[%c0, %c0_0, %c0_1, %c0_2] : memref<1x4x16x8xbf16, #tpu.memory_space<vmem>>, vector<1x4x16x8xbf16>
    %1 = vector.shape_cast %0 : vector<1x4x16x8xbf16> to vector<4x16x8xbf16>
    %2 = vector.shape_cast %1 : vector<4x16x8xbf16> to vector<64x8xbf16>
    %c0_3 = arith.constant 0 : index
    %c0_4 = arith.constant 0 : index
    %3 = vector.load %arg3[%c0_3, %c0_4] : memref<8x4xbf16, #tpu.memory_space<vmem>>, vector<8x4xbf16>
    %cst = arith.constant dense<0.000000e+00> : vector<64x4xf32>
    %4 = tpu.matmul %2, %3, %cst {dimension_numbers = #tpu.dot_dimension_numbers<[1], [0], [0], [1], [0, 0, 1, 1], [], []>} : vector<64x8xbf16>, vector<8x4xbf16>, vector<64x4xf32> -> vector<64x4xf32>
    %5 = vector.shape_cast %4 : vector<64x4xf32> to vector<4x16x4xf32>
    %6 = arith.truncf %5 : vector<4x16x4xf32> to vector<4x16x4xbf16>
    %c0_5 = arith.constant 0 : index
    %c0_6 = arith.constant 0 : index
    %c0_7 = arith.constant 0 : index
    %c0_8 = arith.constant 0 : index
    %7 = vector.load %arg4[%c0_5, %c0_6, %c0_7, %c0_8] : memref<1x4x16x4xbf16, #tpu.memory_space<vmem>>, vector<1x4x16x4xbf16>
    %8 = vector.shape_cast %7 : vector<1x4x16x4xbf16> to vector<4x16x4xbf16>
    %9 = vector.shape_cast %6 : vector<4x16x4xbf16> to vector<1x4x16x4xbf16>
    tpu.vector_store %arg4[%c0_5, %c0_6, %c0_7, %c0_8], %9 {strides = array<i32>} : memref<1x4x16x4xbf16, #tpu.memory_space<vmem>>, vector<1x4x16x4xbf16>,
    %cst_9 = arith.constant dense<0.000000e+00> : vector<4xf32>
    %10 = vector.multi_reduction <add>, %4, %cst_9 [0] : vector<64x4xf32> to vector<4xf32>
    %11 = vector.shape_cast %10 : vector<4xf32> to vector<1x4xf32>
    %12 = vector.shape_cast %11 : vector<1x4xf32> to vector<1x4xf32>
    %13 = vector.broadcast %12 : vector<1x4xf32> to vector<8x4xf32>
    %c0_10 = arith.constant 0 : index
    %c0_11 = arith.constant 0 : index
    %c0_12 = arith.constant 0 : index
    %c0_13 = arith.constant 0 : index
    %14 = vector.load %arg5[%c0_10, %c0_11, %c0_12, %c0_13] : memref<1x1x8x4xf32, #tpu.memory_space<vmem>>, vector<1x1x8x4xf32>
    %15 = vector.shape_cast %14 : vector<1x1x8x4xf32> to vector<8x4xf32>
    %16 = vector.shape_cast %13 : vector<8x4xf32> to vector<1x1x8x4xf32>
    tpu.vector_store %arg5[%c0_10, %c0_11, %c0_12, %c0_13], %16 {strides = array<i32>} : memref<1x1x8x4xf32, #tpu.memory_space<vmem>>, vector<1x1x8x4xf32>,
    %17 = arith.mulf %4, %4 : vector<64x4xf32>
    %cst_14 = arith.constant dense<0.000000e+00> : vector<4xf32>
    %18 = vector.multi_reduction <add>, %17, %cst_14 [0] : vector<64x4xf32> to vector<4xf32>
    %19 = vector.shape_cast %18 : vector<4xf32> to vector<1x4xf32>
    %20 = vector.shape_cast %19 : vector<1x4xf32> to vector<1x4xf32>
    %21 = vector.broadcast %20 : vector<1x4xf32> to vector<8x4xf32>
    %c0_15 = arith.constant 0 : index
    %c0_16 = arith.constant 0 : index
    %c0_17 = arith.constant 0 : index
    %c0_18 = arith.constant 0 : index
    %22 = vector.load %arg6[%c0_15, %c0_16, %c0_17, %c0_18] : memref<1x1x8x4xf32, #tpu.memory_space<vmem>>, vector<1x1x8x4xf32>
    %23 = vector.shape_cast %22 : vector<1x1x8x4xf32> to vector<8x4xf32>
    %24 = vector.shape_cast %21 : vector<8x4xf32> to vector<1x1x8x4xf32>
    tpu.vector_store %arg6[%c0_15, %c0_16, %c0_17, %c0_18], %24 {strides = array<i32>} : memref<1x1x8x4xf32, #tpu.memory_space<vmem>>, vector<1x1x8x4xf32>,
    return
  }
  func.func @transform_0(%arg0: i32, %arg1: i32) -> (i32, i32, i32, i32) {
    %c0_i32 = arith.constant 0 : i32
    %c0_i32_0 = arith.constant 0 : i32
    %c0_i32_1 = arith.constant 0 : i32
    return %arg0, %arg1, %c0_i32, %c0_i32_0 : i32, i32, i32, i32
  }
  func.func @transform_1(%arg0: i32, %arg1: i32) -> (i32, i32) {
    %c0_i32 = arith.constant 0 : i32
    %c0_i32_0 = arith.constant 0 : i32
    %c0_i32_1 = arith.constant 0 : i32
    return %c0_i32, %c0_i32_0 : i32, i32
  }
  func.func @transform_2(%arg0: i32, %arg1: i32) -> (i32, i32, i32, i32) {
    %c0_i32 = arith.constant 0 : i32
    %c0_i32_0 = arith.constant 0 : i32
    %c0_i32_1 = arith.constant 0 : i32
    return %arg0, %arg1, %c0_i32, %c0_i32_0 : i32, i32, i32, i32
  }
  func.func @transform_3(%arg0: i32, %arg1: i32) -> (i32, i32, i32, i32) {
    %c0_i32 = arith.constant 0 : i32
    %c0_i32_0 = arith.constant 0 : i32
    %c0_i32_1 = arith.constant 0 : i32
    return %arg0, %arg1, %c0_i32, %c0_i32_0 : i32, i32, i32, i32
  }
  func.func @transform_4(%arg0: i32, %arg1: i32) -> (i32, i32, i32, i32) {
    %c0_i32 = arith.constant 0 : i32
    %c0_i32_0 = arith.constant 0 : i32
    %c0_i32_1 = arith.constant 0 : i32
    return %arg0, %arg1, %c0_i32, %c0_i32_0 : i32, i32, i32, i32
  }
}

module attributes {stable_mosaic.version = 11 : i64} {
  func.func @_conv2_stats_kernel(%arg0: i32, %arg1: i32, %arg2: memref<1x4x16x4xbf16, #tpu.memory_space<vmem>>, %arg3: memref<1x1x16x4xbf16, #tpu.memory_space<vmem>>, %arg4: memref<1x1x16x4xbf16, #tpu.memory_space<vmem>>, %arg5: memref<1x4xf32, #tpu.memory_space<vmem>>, %arg6: memref<1x4xf32, #tpu.memory_space<vmem>>, %arg7: memref<36x8xbf16, #tpu.memory_space<vmem>>, %arg8: memref<1x4x16x8xbf16, #tpu.memory_space<vmem>>, %arg9: memref<1x1x8x8xf32, #tpu.memory_space<vmem>>, %arg10: memref<1x1x8x8xf32, #tpu.memory_space<vmem>>, %arg11: memref<6x18x4xbf16, #tpu.memory_space<vmem>>) attributes {dimension_semantics = [#tpu.dimension_semantics<parallel>, #tpu.dimension_semantics<parallel>], iteration_bounds = array<i64: 2, 4>, scalar_prefetch = 0 : i64, scratch_operands = 1 : i64, tpu.core_type = #tpu.core_type<tc>, window_params = [{transform_indices = @transform_0, window_bounds = array<i64: 1, 4, 16, 4>}, {transform_indices = @transform_1, window_bounds = array<i64: 1, 1, 16, 4>}, {transform_indices = @transform_2, window_bounds = array<i64: 1, 1, 16, 4>}, {pipeline_mode = #tpu.pipeline_mode<synchronous>, transform_indices = @transform_3, window_bounds = array<i64: 1, 4>}, {pipeline_mode = #tpu.pipeline_mode<synchronous>, transform_indices = @transform_4, window_bounds = array<i64: 1, 4>}, {pipeline_mode = #tpu.pipeline_mode<synchronous>, transform_indices = @transform_5, window_bounds = array<i64: 36, 8>}, {transform_indices = @transform_6, window_bounds = array<i64: 1, 4, 16, 8>}, {transform_indices = @transform_7, window_bounds = array<i64: 1, 1, 8, 8>}, {transform_indices = @transform_8, window_bounds = array<i64: 1, 1, 8, 8>}]} {
    %c0 = arith.constant 0 : index
    %c0_0 = arith.constant 0 : index
    %0 = vector.load %arg5[%c0, %c0_0] : memref<1x4xf32, #tpu.memory_space<vmem>>, vector<1x4xf32>
    %1 = vector.shape_cast %0 : vector<1x4xf32> to vector<1x1x4xf32>
    %c0_1 = arith.constant 0 : index
    %c0_2 = arith.constant 0 : index
    %2 = vector.load %arg6[%c0_1, %c0_2] : memref<1x4xf32, #tpu.memory_space<vmem>>, vector<1x4xf32>
    %3 = vector.shape_cast %2 : vector<1x4xf32> to vector<1x1x4xf32>
    %c0_3 = arith.constant 0 : index
    %c0_4 = arith.constant 0 : index
    %c0_5 = arith.constant 0 : index
    %c0_6 = arith.constant 0 : index
    %4 = vector.load %arg2[%c0_3, %c0_4, %c0_5, %c0_6] : memref<1x4x16x4xbf16, #tpu.memory_space<vmem>>, vector<1x4x16x4xbf16>
    %5 = vector.shape_cast %4 : vector<1x4x16x4xbf16> to vector<4x16x4xbf16>
    %6 = arith.extf %5 : vector<4x16x4xbf16> to vector<4x16x4xf32>
    %7 = vector.broadcast %1 : vector<1x1x4xf32> to vector<4x16x4xf32>
    %8 = arith.mulf %6, %7 : vector<4x16x4xf32>
    %9 = vector.broadcast %3 : vector<1x1x4xf32> to vector<4x16x4xf32>
    %10 = arith.addf %8, %9 : vector<4x16x4xf32>
    %cst = arith.constant 0.000000e+00 : f32
    %11 = vector.broadcast %cst : f32 to vector<4x16x4xf32>
    %12 = arith.cmpf ogt, %10, %11 : vector<4x16x4xf32>
    %cst_7 = arith.constant 1.000000e-01 : f32
    %13 = vector.broadcast %cst_7 : f32 to vector<4x16x4xf32>
    %14 = arith.mulf %13, %10 : vector<4x16x4xf32>
    %15 = arith.select %12, %10, %14 : vector<4x16x4xi1>, vector<4x16x4xf32>
    %c0_8 = arith.constant 0 : index
    %c0_9 = arith.constant 0 : index
    %c0_10 = arith.constant 0 : index
    %c0_11 = arith.constant 0 : index
    %16 = vector.load %arg3[%c0_8, %c0_9, %c0_10, %c0_11] : memref<1x1x16x4xbf16, #tpu.memory_space<vmem>>, vector<1x1x16x4xbf16>
    %17 = vector.shape_cast %16 : vector<1x1x16x4xbf16> to vector<1x16x4xbf16>
    %18 = arith.extf %17 : vector<1x16x4xbf16> to vector<1x16x4xf32>
    %19 = vector.broadcast %1 : vector<1x1x4xf32> to vector<1x16x4xf32>
    %20 = arith.mulf %18, %19 : vector<1x16x4xf32>
    %21 = vector.broadcast %3 : vector<1x1x4xf32> to vector<1x16x4xf32>
    %22 = arith.addf %20, %21 : vector<1x16x4xf32>
    %cst_12 = arith.constant 0.000000e+00 : f32
    %23 = vector.broadcast %cst_12 : f32 to vector<1x16x4xf32>
    %24 = arith.cmpf ogt, %22, %23 : vector<1x16x4xf32>
    %cst_13 = arith.constant 1.000000e-01 : f32
    %25 = vector.broadcast %cst_13 : f32 to vector<1x16x4xf32>
    %26 = arith.mulf %25, %22 : vector<1x16x4xf32>
    %27 = arith.select %24, %22, %26 : vector<1x16x4xi1>, vector<1x16x4xf32>
    %c0_i32 = arith.constant 0 : i32
    %28 = arith.cmpi sgt, %arg1, %c0_i32 : i32
    %29 = arith.extui %28 : i1 to i32
    %30 = arith.sitofp %29 : i32 to f32
    %31 = vector.broadcast %30 : f32 to vector<1x16x4xf32>
    %32 = arith.mulf %27, %31 : vector<1x16x4xf32>
    %c0_14 = arith.constant 0 : index
    %c0_15 = arith.constant 0 : index
    %c0_16 = arith.constant 0 : index
    %c0_17 = arith.constant 0 : index
    %33 = vector.load %arg4[%c0_14, %c0_15, %c0_16, %c0_17] : memref<1x1x16x4xbf16, #tpu.memory_space<vmem>>, vector<1x1x16x4xbf16>
    %34 = vector.shape_cast %33 : vector<1x1x16x4xbf16> to vector<1x16x4xbf16>
    %35 = arith.extf %34 : vector<1x16x4xbf16> to vector<1x16x4xf32>
    %36 = vector.broadcast %1 : vector<1x1x4xf32> to vector<1x16x4xf32>
    %37 = arith.mulf %35, %36 : vector<1x16x4xf32>
    %38 = vector.broadcast %3 : vector<1x1x4xf32> to vector<1x16x4xf32>
    %39 = arith.addf %37, %38 : vector<1x16x4xf32>
    %cst_18 = arith.constant 0.000000e+00 : f32
    %40 = vector.broadcast %cst_18 : f32 to vector<1x16x4xf32>
    %41 = arith.cmpf ogt, %39, %40 : vector<1x16x4xf32>
    %cst_19 = arith.constant 1.000000e-01 : f32
    %42 = vector.broadcast %cst_19 : f32 to vector<1x16x4xf32>
    %43 = arith.mulf %42, %39 : vector<1x16x4xf32>
    %44 = arith.select %41, %39, %43 : vector<1x16x4xi1>, vector<1x16x4xf32>
    %c3_i32 = arith.constant 3 : i32
    %45 = arith.cmpi slt, %arg1, %c3_i32 : i32
    %46 = arith.extui %45 : i1 to i32
    %47 = arith.sitofp %46 : i32 to f32
    %48 = vector.broadcast %47 : f32 to vector<1x16x4xf32>
    %49 = arith.mulf %44, %48 : vector<1x16x4xf32>
    %cst_20 = arith.constant 0.000000e+00 : bf16
    %50 = vector.broadcast %cst_20 : bf16 to vector<6x1x4xbf16>
    %c0_21 = arith.constant 0 : index
    %c0_22 = arith.constant 0 : index
    %c0_23 = arith.constant 0 : index
    %51 = vector.load %arg11[%c0_21, %c0_22, %c0_23] : memref<6x18x4xbf16, #tpu.memory_space<vmem>>, vector<6x1x4xbf16>
    tpu.vector_store %arg11[%c0_21, %c0_22, %c0_23], %50 {strides = array<i32>} : memref<6x18x4xbf16, #tpu.memory_space<vmem>>, vector<6x1x4xbf16>,
    %c0_24 = arith.constant 0 : index
    %c17 = arith.constant 17 : index
    %c0_25 = arith.constant 0 : index
    %52 = vector.load %arg11[%c0_24, %c17, %c0_25] : memref<6x18x4xbf16, #tpu.memory_space<vmem>>, vector<6x1x4xbf16>
    tpu.vector_store %arg11[%c0_24, %c17, %c0_25], %50 {strides = array<i32>} : memref<6x18x4xbf16, #tpu.memory_space<vmem>>, vector<6x1x4xbf16>,
    %53 = arith.truncf %32 : vector<1x16x4xf32> to vector<1x16x4xbf16>
    %c0_26 = arith.constant 0 : index
    %c1 = arith.constant 1 : index
    %c0_27 = arith.constant 0 : index
    %54 = vector.load %arg11[%c0_26, %c1, %c0_27] : memref<6x18x4xbf16, #tpu.memory_space<vmem>>, vector<1x16x4xbf16>
    tpu.vector_store %arg11[%c0_26, %c1, %c0_27], %53 {strides = array<i32>} : memref<6x18x4xbf16, #tpu.memory_space<vmem>>, vector<1x16x4xbf16>,
    %55 = arith.truncf %49 : vector<1x16x4xf32> to vector<1x16x4xbf16>
    %c5 = arith.constant 5 : index
    %c1_28 = arith.constant 1 : index
    %c0_29 = arith.constant 0 : index
    %56 = vector.load %arg11[%c5, %c1_28, %c0_29] : memref<6x18x4xbf16, #tpu.memory_space<vmem>>, vector<1x16x4xbf16>
    tpu.vector_store %arg11[%c5, %c1_28, %c0_29], %55 {strides = array<i32>} : memref<6x18x4xbf16, #tpu.memory_space<vmem>>, vector<1x16x4xbf16>,
    %57 = arith.truncf %15 : vector<4x16x4xf32> to vector<4x16x4xbf16>
    %c1_30 = arith.constant 1 : index
    %c1_31 = arith.constant 1 : index
    %c0_32 = arith.constant 0 : index
    %58 = vector.load %arg11[%c1_30, %c1_31, %c0_32] : memref<6x18x4xbf16, #tpu.memory_space<vmem>>, vector<4x16x4xbf16>
    tpu.vector_store %arg11[%c1_30, %c1_31, %c0_32], %57 {strides = array<i32>} : memref<6x18x4xbf16, #tpu.memory_space<vmem>>, vector<4x16x4xbf16>,
    %c0_33 = arith.constant 0 : index
    %c0_34 = arith.constant 0 : index
    %c0_35 = arith.constant 0 : index
    %59 = vector.load %arg11[%c0_33, %c0_34, %c0_35] : memref<6x18x4xbf16, #tpu.memory_space<vmem>>, vector<4x16x4xbf16>
    %c0_36 = arith.constant 0 : index
    %c1_37 = arith.constant 1 : index
    %c0_38 = arith.constant 0 : index
    %60 = vector.load %arg11[%c0_36, %c1_37, %c0_38] : memref<6x18x4xbf16, #tpu.memory_space<vmem>>, vector<4x16x4xbf16>
    %c0_39 = arith.constant 0 : index
    %c2 = arith.constant 2 : index
    %c0_40 = arith.constant 0 : index
    %61 = vector.load %arg11[%c0_39, %c2, %c0_40] : memref<6x18x4xbf16, #tpu.memory_space<vmem>>, vector<4x16x4xbf16>
    %c1_41 = arith.constant 1 : index
    %c0_42 = arith.constant 0 : index
    %c0_43 = arith.constant 0 : index
    %62 = vector.load %arg11[%c1_41, %c0_42, %c0_43] : memref<6x18x4xbf16, #tpu.memory_space<vmem>>, vector<4x16x4xbf16>
    %c1_44 = arith.constant 1 : index
    %c1_45 = arith.constant 1 : index
    %c0_46 = arith.constant 0 : index
    %63 = vector.load %arg11[%c1_44, %c1_45, %c0_46] : memref<6x18x4xbf16, #tpu.memory_space<vmem>>, vector<4x16x4xbf16>
    %c1_47 = arith.constant 1 : index
    %c2_48 = arith.constant 2 : index
    %c0_49 = arith.constant 0 : index
    %64 = vector.load %arg11[%c1_47, %c2_48, %c0_49] : memref<6x18x4xbf16, #tpu.memory_space<vmem>>, vector<4x16x4xbf16>
    %c2_50 = arith.constant 2 : index
    %c0_51 = arith.constant 0 : index
    %c0_52 = arith.constant 0 : index
    %65 = vector.load %arg11[%c2_50, %c0_51, %c0_52] : memref<6x18x4xbf16, #tpu.memory_space<vmem>>, vector<4x16x4xbf16>
    %c2_53 = arith.constant 2 : index
    %c1_54 = arith.constant 1 : index
    %c0_55 = arith.constant 0 : index
    %66 = vector.load %arg11[%c2_53, %c1_54, %c0_55] : memref<6x18x4xbf16, #tpu.memory_space<vmem>>, vector<4x16x4xbf16>
    %c2_56 = arith.constant 2 : index
    %c2_57 = arith.constant 2 : index
    %c0_58 = arith.constant 0 : index
    %67 = vector.load %arg11[%c2_56, %c2_57, %c0_58] : memref<6x18x4xbf16, #tpu.memory_space<vmem>>, vector<4x16x4xbf16>
    %68 = tpu.concatenate %59, %60, %61, %62, %63, %64, %65, %66, %67 in 2 : vector<4x16x4xbf16>, vector<4x16x4xbf16>, vector<4x16x4xbf16>, vector<4x16x4xbf16>, vector<4x16x4xbf16>, vector<4x16x4xbf16>, vector<4x16x4xbf16>, vector<4x16x4xbf16>, vector<4x16x4xbf16> -> vector<4x16x36xbf16>
    %69 = vector.shape_cast %68 : vector<4x16x36xbf16> to vector<64x36xbf16>
    %c0_59 = arith.constant 0 : index
    %c0_60 = arith.constant 0 : index
    %70 = vector.load %arg7[%c0_59, %c0_60] : memref<36x8xbf16, #tpu.memory_space<vmem>>, vector<36x8xbf16>
    %cst_61 = arith.constant dense<0.000000e+00> : vector<64x8xf32>
    %71 = tpu.matmul %69, %70, %cst_61 {dimension_numbers = #tpu.dot_dimension_numbers<[1], [0], [0], [1], [0, 0, 1, 1], [], []>} : vector<64x36xbf16>, vector<36x8xbf16>, vector<64x8xf32> -> vector<64x8xf32>
    %72 = vector.shape_cast %71 : vector<64x8xf32> to vector<4x16x8xf32>
    %73 = arith.truncf %72 : vector<4x16x8xf32> to vector<4x16x8xbf16>
    %c0_62 = arith.constant 0 : index
    %c0_63 = arith.constant 0 : index
    %c0_64 = arith.constant 0 : index
    %c0_65 = arith.constant 0 : index
    %74 = vector.load %arg8[%c0_62, %c0_63, %c0_64, %c0_65] : memref<1x4x16x8xbf16, #tpu.memory_space<vmem>>, vector<1x4x16x8xbf16>
    %75 = vector.shape_cast %74 : vector<1x4x16x8xbf16> to vector<4x16x8xbf16>
    %76 = vector.shape_cast %73 : vector<4x16x8xbf16> to vector<1x4x16x8xbf16>
    tpu.vector_store %arg8[%c0_62, %c0_63, %c0_64, %c0_65], %76 {strides = array<i32>} : memref<1x4x16x8xbf16, #tpu.memory_space<vmem>>, vector<1x4x16x8xbf16>,
    %cst_66 = arith.constant dense<0.000000e+00> : vector<8xf32>
    %77 = vector.multi_reduction <add>, %71, %cst_66 [0] : vector<64x8xf32> to vector<8xf32>
    %78 = vector.shape_cast %77 : vector<8xf32> to vector<1x8xf32>
    %79 = vector.shape_cast %78 : vector<1x8xf32> to vector<1x8xf32>
    %80 = vector.broadcast %79 : vector<1x8xf32> to vector<8x8xf32>
    %c0_67 = arith.constant 0 : index
    %c0_68 = arith.constant 0 : index
    %c0_69 = arith.constant 0 : index
    %c0_70 = arith.constant 0 : index
    %81 = vector.load %arg9[%c0_67, %c0_68, %c0_69, %c0_70] : memref<1x1x8x8xf32, #tpu.memory_space<vmem>>, vector<1x1x8x8xf32>
    %82 = vector.shape_cast %81 : vector<1x1x8x8xf32> to vector<8x8xf32>
    %83 = vector.shape_cast %80 : vector<8x8xf32> to vector<1x1x8x8xf32>
    tpu.vector_store %arg9[%c0_67, %c0_68, %c0_69, %c0_70], %83 {strides = array<i32>} : memref<1x1x8x8xf32, #tpu.memory_space<vmem>>, vector<1x1x8x8xf32>,
    %84 = arith.mulf %71, %71 : vector<64x8xf32>
    %cst_71 = arith.constant dense<0.000000e+00> : vector<8xf32>
    %85 = vector.multi_reduction <add>, %84, %cst_71 [0] : vector<64x8xf32> to vector<8xf32>
    %86 = vector.shape_cast %85 : vector<8xf32> to vector<1x8xf32>
    %87 = vector.shape_cast %86 : vector<1x8xf32> to vector<1x8xf32>
    %88 = vector.broadcast %87 : vector<1x8xf32> to vector<8x8xf32>
    %c0_72 = arith.constant 0 : index
    %c0_73 = arith.constant 0 : index
    %c0_74 = arith.constant 0 : index
    %c0_75 = arith.constant 0 : index
    %89 = vector.load %arg10[%c0_72, %c0_73, %c0_74, %c0_75] : memref<1x1x8x8xf32, #tpu.memory_space<vmem>>, vector<1x1x8x8xf32>
    %90 = vector.shape_cast %89 : vector<1x1x8x8xf32> to vector<8x8xf32>
    %91 = vector.shape_cast %88 : vector<8x8xf32> to vector<1x1x8x8xf32>
    tpu.vector_store %arg10[%c0_72, %c0_73, %c0_74, %c0_75], %91 {strides = array<i32>} : memref<1x1x8x8xf32, #tpu.memory_space<vmem>>, vector<1x1x8x8xf32>,
    return
  }
  func.func @transform_0(%arg0: i32, %arg1: i32) -> (i32, i32, i32, i32) {
    %c0_i32 = arith.constant 0 : i32
    %c0_i32_0 = arith.constant 0 : i32
    %c0_i32_1 = arith.constant 0 : i32
    return %arg0, %arg1, %c0_i32, %c0_i32_0 : i32, i32, i32, i32
  }
  func.func @transform_1(%arg0: i32, %arg1: i32) -> (i32, i32, i32, i32) {
    %c4_i32 = arith.constant 4 : i32
    %0 = arith.muli %arg1, %c4_i32 : i32
    %c1_i32 = arith.constant 1 : i32
    %1 = arith.subi %0, %c1_i32 : i32
    %c0_i32 = arith.constant 0 : i32
    %2 = arith.maxsi %1, %c0_i32 : i32
    %c0_i32_0 = arith.constant 0 : i32
    %c0_i32_1 = arith.constant 0 : i32
    %c0_i32_2 = arith.constant 0 : i32
    return %arg0, %2, %c0_i32_0, %c0_i32_1 : i32, i32, i32, i32
  }
  func.func @transform_2(%arg0: i32, %arg1: i32) -> (i32, i32, i32, i32) {
    %c4_i32 = arith.constant 4 : i32
    %0 = arith.muli %arg1, %c4_i32 : i32
    %c4_i32_0 = arith.constant 4 : i32
    %1 = arith.addi %0, %c4_i32_0 : i32
    %c15_i32 = arith.constant 15 : i32
    %2 = arith.minsi %1, %c15_i32 : i32
    %c0_i32 = arith.constant 0 : i32
    %c0_i32_1 = arith.constant 0 : i32
    %c0_i32_2 = arith.constant 0 : i32
    return %arg0, %2, %c0_i32, %c0_i32_1 : i32, i32, i32, i32
  }
  func.func @transform_3(%arg0: i32, %arg1: i32) -> (i32, i32) {
    %c0_i32 = arith.constant 0 : i32
    %c0_i32_0 = arith.constant 0 : i32
    %c0_i32_1 = arith.constant 0 : i32
    return %c0_i32, %c0_i32_0 : i32, i32
  }
  func.func @transform_4(%arg0: i32, %arg1: i32) -> (i32, i32) {
    %c0_i32 = arith.constant 0 : i32
    %c0_i32_0 = arith.constant 0 : i32
    %c0_i32_1 = arith.constant 0 : i32
    return %c0_i32, %c0_i32_0 : i32, i32
  }
  func.func @transform_5(%arg0: i32, %arg1: i32) -> (i32, i32) {
    %c0_i32 = arith.constant 0 : i32
    %c0_i32_0 = arith.constant 0 : i32
    %c0_i32_1 = arith.constant 0 : i32
    return %c0_i32, %c0_i32_0 : i32, i32
  }
  func.func @transform_6(%arg0: i32, %arg1: i32) -> (i32, i32, i32, i32) {
    %c0_i32 = arith.constant 0 : i32
    %c0_i32_0 = arith.constant 0 : i32
    %c0_i32_1 = arith.constant 0 : i32
    return %arg0, %arg1, %c0_i32, %c0_i32_0 : i32, i32, i32, i32
  }
  func.func @transform_7(%arg0: i32, %arg1: i32) -> (i32, i32, i32, i32) {
    %c0_i32 = arith.constant 0 : i32
    %c0_i32_0 = arith.constant 0 : i32
    %c0_i32_1 = arith.constant 0 : i32
    return %arg0, %arg1, %c0_i32, %c0_i32_0 : i32, i32, i32, i32
  }
  func.func @transform_8(%arg0: i32, %arg1: i32) -> (i32, i32, i32, i32) {
    %c0_i32 = arith.constant 0 : i32
    %c0_i32_0 = arith.constant 0 : i32
    %c0_i32_1 = arith.constant 0 : i32
    return %arg0, %arg1, %c0_i32, %c0_i32_0 : i32, i32, i32, i32
  }
}

module attributes {stable_mosaic.version = 11 : i64} {
  func.func @_bn2_residual_kernel(%arg0: i32, %arg1: i32, %arg2: memref<1x4x16x8xbf16, #tpu.memory_space<vmem>>, %arg3: memref<1x4x16x8xf32, #tpu.memory_space<vmem>>, %arg4: memref<1x8xf32, #tpu.memory_space<vmem>>, %arg5: memref<1x8xf32, #tpu.memory_space<vmem>>, %arg6: memref<1x4x16x8xf32, #tpu.memory_space<vmem>>) attributes {dimension_semantics = [#tpu.dimension_semantics<parallel>, #tpu.dimension_semantics<parallel>], iteration_bounds = array<i64: 2, 4>, scalar_prefetch = 0 : i64, scratch_operands = 0 : i64, tpu.core_type = #tpu.core_type<tc>, window_params = [{transform_indices = @transform_0, window_bounds = array<i64: 1, 4, 16, 8>}, {transform_indices = @transform_1, window_bounds = array<i64: 1, 4, 16, 8>}, {pipeline_mode = #tpu.pipeline_mode<synchronous>, transform_indices = @transform_2, window_bounds = array<i64: 1, 8>}, {pipeline_mode = #tpu.pipeline_mode<synchronous>, transform_indices = @transform_3, window_bounds = array<i64: 1, 8>}, {transform_indices = @transform_4, window_bounds = array<i64: 1, 4, 16, 8>}]} {
    %c0 = arith.constant 0 : index
    %c0_0 = arith.constant 0 : index
    %c0_1 = arith.constant 0 : index
    %c0_2 = arith.constant 0 : index
    %0 = vector.load %arg2[%c0, %c0_0, %c0_1, %c0_2] : memref<1x4x16x8xbf16, #tpu.memory_space<vmem>>, vector<1x4x16x8xbf16>
    %1 = vector.shape_cast %0 : vector<1x4x16x8xbf16> to vector<4x16x8xbf16>
    %2 = arith.extf %1 : vector<4x16x8xbf16> to vector<4x16x8xf32>
    %c0_3 = arith.constant 0 : index
    %c0_4 = arith.constant 0 : index
    %3 = vector.load %arg4[%c0_3, %c0_4] : memref<1x8xf32, #tpu.memory_space<vmem>>, vector<1x8xf32>
    %4 = vector.shape_cast %3 : vector<1x8xf32> to vector<1x1x8xf32>
    %5 = vector.broadcast %4 : vector<1x1x8xf32> to vector<4x16x8xf32>
    %6 = arith.mulf %2, %5 : vector<4x16x8xf32>
    %c0_5 = arith.constant 0 : index
    %c0_6 = arith.constant 0 : index
    %7 = vector.load %arg5[%c0_5, %c0_6] : memref<1x8xf32, #tpu.memory_space<vmem>>, vector<1x8xf32>
    %8 = vector.shape_cast %7 : vector<1x8xf32> to vector<1x1x8xf32>
    %9 = vector.broadcast %8 : vector<1x1x8xf32> to vector<4x16x8xf32>
    %10 = arith.addf %6, %9 : vector<4x16x8xf32>
    %cst = arith.constant 0.000000e+00 : f32
    %11 = vector.broadcast %cst : f32 to vector<4x16x8xf32>
    %12 = arith.cmpf ogt, %10, %11 : vector<4x16x8xf32>
    %cst_7 = arith.constant 1.000000e-01 : f32
    %13 = vector.broadcast %cst_7 : f32 to vector<4x16x8xf32>
    %14 = arith.mulf %13, %10 : vector<4x16x8xf32>
    %15 = arith.select %12, %10, %14 : vector<4x16x8xi1>, vector<4x16x8xf32>
    %c0_8 = arith.constant 0 : index
    %c0_9 = arith.constant 0 : index
    %c0_10 = arith.constant 0 : index
    %c0_11 = arith.constant 0 : index
    %16 = vector.load %arg3[%c0_8, %c0_9, %c0_10, %c0_11] : memref<1x4x16x8xf32, #tpu.memory_space<vmem>>, vector<1x4x16x8xf32>
    %17 = vector.shape_cast %16 : vector<1x4x16x8xf32> to vector<4x16x8xf32>
    %18 = arith.addf %15, %17 : vector<4x16x8xf32>
    %c0_12 = arith.constant 0 : index
    %c0_13 = arith.constant 0 : index
    %c0_14 = arith.constant 0 : index
    %c0_15 = arith.constant 0 : index
    %19 = vector.load %arg6[%c0_12, %c0_13, %c0_14, %c0_15] : memref<1x4x16x8xf32, #tpu.memory_space<vmem>>, vector<1x4x16x8xf32>
    %20 = vector.shape_cast %19 : vector<1x4x16x8xf32> to vector<4x16x8xf32>
    %21 = vector.shape_cast %18 : vector<4x16x8xf32> to vector<1x4x16x8xf32>
    tpu.vector_store %arg6[%c0_12, %c0_13, %c0_14, %c0_15], %21 {strides = array<i32>} : memref<1x4x16x8xf32, #tpu.memory_space<vmem>>, vector<1x4x16x8xf32>,
    return
  }
  func.func @transform_0(%arg0: i32, %arg1: i32) -> (i32, i32, i32, i32) {
    %c0_i32 = arith.constant 0 : i32
    %c0_i32_0 = arith.constant 0 : i32
    %c0_i32_1 = arith.constant 0 : i32
    return %arg0, %arg1, %c0_i32, %c0_i32_0 : i32, i32, i32, i32
  }
  func.func @transform_1(%arg0: i32, %arg1: i32) -> (i32, i32, i32, i32) {
    %c0_i32 = arith.constant 0 : i32
    %c0_i32_0 = arith.constant 0 : i32
    %c0_i32_1 = arith.constant 0 : i32
    return %arg0, %arg1, %c0_i32, %c0_i32_0 : i32, i32, i32, i32
  }
  func.func @transform_2(%arg0: i32, %arg1: i32) -> (i32, i32) {
    %c0_i32 = arith.constant 0 : i32
    %c0_i32_0 = arith.constant 0 : i32
    %c0_i32_1 = arith.constant 0 : i32
    return %c0_i32, %c0_i32_0 : i32, i32
  }
  func.func @transform_3(%arg0: i32, %arg1: i32) -> (i32, i32) {
    %c0_i32 = arith.constant 0 : i32
    %c0_i32_0 = arith.constant 0 : i32
    %c0_i32_1 = arith.constant 0 : i32
    return %c0_i32, %c0_i32_0 : i32, i32
  }
  func.func @transform_4(%arg0: i32, %arg1: i32) -> (i32, i32, i32, i32) {
    %c0_i32 = arith.constant 0 : i32
    %c0_i32_0 = arith.constant 0 : i32
    %c0_i32_1 = arith.constant 0 : i32
    return %arg0, %arg1, %c0_i32, %c0_i32_0 : i32, i32, i32, i32
  }
}

</mosaic_0001>

<llo_original>
// kernel: resblock_pallas.3
$region0: #{resblock_pallas.3}
  #allocation0 [shape = 'u32[]', space=smem, size = 0x4, offset = 0x4, fixed_abs, tag = 'smem constant byte address 0x4 - core index']
  #allocation1 [shape = 'u32[144,128]{1,0:T(1,128)}', space=vmem, size = 0x12000, scoped, tag = 'internal scratch']
  %s0 = inlined_call_operand.vmem [shape: bf16[2,16,16,8], index: 0, kind: input, shape index: {}]
  %s1 = inlined_call_operand.vmem [shape: bf16[8,4], index: 1, kind: input, shape index: {}]
  %s2 = inlined_call_operand.vmem [shape: bf16[2,16,16,4], index: 2, kind: output, shape index: {0}]
  %s3 = inlined_call_operand.vmem [shape: f32[2,4,8,4], index: 3, kind: output, shape index: {1}]
  %s4 = inlined_call_operand.vmem [shape: f32[2,4,8,4], index: 4, kind: output, shape index: {2}]
  %5 = xla_tuple %s2, %s3, %s4
  %s6 = sld [smem:[#allocation0]]
  $region57: #{resblock_pallas.3} parent=0
    _
  %s8 = ssub.s32 1, %s6
  %s9 = scalar_select 0, %s8, %s6
  loop: start=0, step=1, limit=10
  $region2: #{resblock_pallas.3} parent=0 // loop_pre_header
    _
  $region3: #{resblock_pallas.3} parent=0 // loop_header
    %s11 = sphi 0, %s15
    %p12 = scmp.ge.s32.totalorder %s11, 10
    %s18 = sphi 0, %s30
    %s19 = sphi 0, %s26
    %s20 = sphi 0, %s18
    %s21 = sphi 0, %s19
    %s22 = sphi 0, %s20
    %s23 = sphi 0, %s21
    %s35 = sphi 0, %s37
    %s38 = sphi 0, %s35
    %s39 = sphi 0, %s38
    %s55 = sphi 0, %s39
    %s59 = sphi 0, %s59
    %s61 = sphi 0, %s59
    %s62 = sphi 0, %s61
    %s76 = sphi 0, %s62
    %s84 = sphi 0, %s86
    %s87 = sphi 0, %s84
    %s88 = sphi 0, %s87
    %s104 = sphi 0, %s88
    %s112 = sphi 0, %s114
    %s115 = sphi 0, %s112
    %s116 = sphi 0, %s115
    %s132 = sphi 0, %s116
    %s140 = sphi 0, %s142
    %s143 = sphi 0, %s140
    %s144 = sphi 0, %s143
    %s160 = sphi 0, %s144
  $region4: #{resblock_pallas.3} parent=0 // loop_header_branch
    %14 = sbr.rel (%p12) target = $region8
  $region5: #{resblock_pallas.3} parent=0 // loop_body
    %s16 = ssub.s32 %s11, 1
    %s17 = ssub.s32 %s11, 2
    %s24 = sadd.s32 1, %s19
    %p25 = scmp.ge.s32.totalorder %s24, 4
    %s26 = scalar_select %p25, 0, %s24
    %s27 = sadd.s32 1, %s18
    %s28 = scalar_select %p25, %s27, %s18
    %p29 = scmp.ge.s32.totalorder %s28, 2
    %s30 = scalar_select %p29, 0, %s28
    %s31 = ssub.s32 %s18, %s30
    %s32 = ssub.s32 %s19, %s26
    %s33 = sor.u32 %s31, %s32
    %p34 = scmp.eq.s32.totalorder %s33, 0
    %s36 = sadd.s32 %s35, 1
    %s37 = scalar_select %p34, %s35, %s36
    %p40 = pneg %p34
    %p41 = scmp.eq.s32.totalorder %s11, 7
    %p42 = por %p40, %p41
    %p43 = scmp.ne.s32.totalorder %s35, %s38
    %p44 = scmp.eq.s32.totalorder %s11, 0
    %p45 = por %p43, %p44
    %p46 = scmp.ne.s32.totalorder %s35, %s38
    %p47 = scmp.eq.s32.totalorder %s16, 7
    %p48 = por %p46, %p47
    %p49 = scmp.ne.s32.totalorder %s38, %s39
    %p50 = scmp.eq.s32.totalorder %s16, 0
    %p51 = por %p49, %p50
    %p52 = scmp.ne.s32.totalorder %s38, %s39
    %p53 = scmp.eq.s32.totalorder %s17, 7
    %p54 = por %p52, %p53
    %p56 = scmp.ne.s32.totalorder %s39, %s55
    %p57 = scmp.eq.s32.totalorder %s17, 0
    %p58 = por %p56, %p57
    %s60 = sadd.s32 %s59, 1
    %p63 = scmp.eq.s32.totalorder %s11, 7
    %p64 = scmp.ne.s32.totalorder %s59, %s61
    %p65 = scmp.eq.s32.totalorder %s11, 0
    %p66 = por %p64, %p65
    %p67 = scmp.ne.s32.totalorder %s59, %s61
    %p68 = scmp.eq.s32.totalorder %s16, 7
    %p69 = por %p67, %p68
    %p70 = scmp.ne.s32.totalorder %s61, %s62
    %p71 = scmp.eq.s32.totalorder %s16, 0
    %p72 = por %p70, %p71
    %p73 = scmp.ne.s32.totalorder %s61, %s62
    %p74 = scmp.eq.s32.totalorder %s17, 7
    %p75 = por %p73, %p74
    %p77 = scmp.ne.s32.totalorder %s62, %s76
    %p78 = scmp.eq.s32.totalorder %s17, 0
    %p79 = por %p77, %p78
    %s80 = ssub.s32 %s18, %s30
    %s81 = ssub.s32 %s19, %s26
    %s82 = sor.u32 %s80, %s81
    %p83 = scmp.eq.s32.totalorder %s82, 0
    %s85 = sadd.s32 %s84, 1
    %s86 = scalar_select %p83, %s84, %s85
    %p89 = pneg %p83
    %p90 = scmp.eq.s32.totalorder %s11, 7
    %p91 = por %p89, %p90
    %p92 = scmp.ne.s32.totalorder %s84, %s87
    %p93 = scmp.eq.s32.totalorder %s11, 0
    %p94 = por %p92, %p93
    %p95 = scmp.ne.s32.totalorder %s84, %s87
    %p96 = scmp.eq.s32.totalorder %s16, 7
    %p97 = por %p95, %p96
    %p98 = scmp.ne.s32.totalorder %s87, %s88
    %p99 = scmp.eq.s32.totalorder %s16, 0
    %p100 = por %p98, %p99
    %p101 = scmp.ne.s32.totalorder %s87, %s88
    %p102 = scmp.eq.s32.totalorder %s17, 7
    %p103 = por %p101, %p102
    %p105 = scmp.ne.s32.totalorder %s88, %s104
    %p106 = scmp.eq.s32.totalorder %s17, 0
    %p107 = por %p105, %p106
    %s108 = ssub.s32 %s18, %s30
    %s109 = ssub.s32 %s19, %s26
    %s110 = sor.u32 %s108, %s109
    %p111 = scmp.eq.s32.totalorder %s110, 0
    %s113 = sadd.s32 %s112, 1
    %s114 = scalar_select %p111, %s112, %s113
    %p117 = pneg %p111
    %p118 = scmp.eq.s32.totalorder %s11, 7
    %p119 = por %p117, %p118
    %p120 = scmp.ne.s32.totalorder %s112, %s115
    %p121 = scmp.eq.s32.totalorder %s11, 0
    %p122 = por %p120, %p121
    %p123 = scmp.ne.s32.totalorder %s112, %s115
    %p124 = scmp.eq.s32.totalorder %s16, 7
    %p125 = por %p123, %p124
    %p126 = scmp.ne.s32.totalorder %s115, %s116
    %p127 = scmp.eq.s32.totalorder %s16, 0
    %p128 = por %p126, %p127
    %p129 = scmp.ne.s32.totalorder %s115, %s116
    %p130 = scmp.eq.s32.totalorder %s17, 7
    %p131 = por %p129, %p130
    %p133 = scmp.ne.s32.totalorder %s116, %s132
    %p134 = scmp.eq.s32.totalorder %s17, 0
    %p135 = por %p133, %p134
    %s136 = ssub.s32 %s18, %s30
    %s137 = ssub.s32 %s19, %s26
    %s138 = sor.u32 %s136, %s137
    %p139 = scmp.eq.s32.totalorder %s138, 0
    %s141 = sadd.s32 %s140, 1
    %s142 = scalar_select %p139, %s140, %s141
    %p145 = pneg %p139
    %p146 = scmp.eq.s32.totalorder %s11, 7
    %p147 = por %p145, %p146
    %p148 = scmp.ne.s32.totalorder %s140, %s143
    %p149 = scmp.eq.s32.totalorder %s11, 0
    %p150 = por %p148, %p149
    %p151 = scmp.ne.s32.totalorder %s140, %s143
    %p152 = scmp.eq.s32.totalorder %s16, 7
    %p153 = por %p151, %p152
    %p154 = scmp.ne.s32.totalorder %s143, %s144
    %p155 = scmp.eq.s32.totalorder %s16, 0
    %p156 = por %p154, %p155
    %p157 = scmp.ne.s32.totalorder %s143, %s144
    %p158 = scmp.eq.s32.totalorder %s17, 7
    %p159 = por %p157, %p158
    %p161 = scmp.ne.s32.totalorder %s144, %s160
    %p162 = scmp.eq.s32.totalorder %s17, 0
    %p163 = por %p161, %p162
    %p164 = scmp.le.s32.totalorder 1, %s11
    %p165 = scmp.lt.s32.totalorder %s11, 9
    %p166 = pnand %p164, %p165
    %p167 = pneg %p166
    // Predicated region
    $region9: #{resblock_pallas.3} parent=5 // pred_check
      _
    $region10: #{resblock_pallas.3} parent=5 // pred_check_branch
      %169 = sbr.rel (%p166) target = $region12
    $region11: #{resblock_pallas.3} parent=5 // pred_region
      %s170 = ssub.s32 %s11, 1
      // Predicated region
      $region13: #{resblock_pallas.3} parent=11 // pred_check
        %p171 = pneg %p72
      $region14: #{resblock_pallas.3} parent=11 // pred_check_branch
        %173 = sbr.rel (%p171) target = $region16
      $region15: #{resblock_pallas.3} parent=11 // pred_region
        _
      $region16: #{resblock_pallas.3} parent=11 // pred_fallthru
        _
    $region12: #{resblock_pallas.3} parent=5 // pred_fallthru
      _
    %p174 = scmp.lt.s32.totalorder %s11, 8
    // Predicated region
    $region17: #{resblock_pallas.3} parent=5 // pred_check
      %p175 = pneg %p174
    $region18: #{resblock_pallas.3} parent=5 // pred_check_branch
      %177 = sbr.rel (%p175) target = $region20
    $region19: #{resblock_pallas.3} parent=5 // pred_region
      // Predicated region
      $region21: #{resblock_pallas.3} parent=19 // pred_check
        %p178 = pneg %p45
      $region22: #{resblock_pallas.3} parent=19 // pred_check_branch
        %180 = sbr.rel (%p178) target = $region24
      $region23: #{resblock_pallas.3} parent=19 // pred_region
        %s181 = smul.u32 4, %s19
        %p182 = scmp.lt.s32.totalorder %s18, 1
        %s183 = scalar_select %p182, %s18, 1
        %p184 = scmp.lt.s32.totalorder %s181, 15
        %s185 = scalar_select %p184, %s181, 15
        %s186 = smul.addr %s185, 2
        %s187 = smul.addr %s183, 32
        %s188 = sadd.s32 %s186, %s187
        %s189 = smul.addr %s188, 4
        %s190 = scalar_lea.vmem %s0, %s189
        %s191 = smul.u32 4, %s19
      $region24: #{resblock_pallas.3} parent=19 // pred_fallthru
        _
    $region20: #{resblock_pallas.3} parent=5 // pred_fallthru
      _
    %p192 = scmp.le.s32.totalorder 1, %s11
    %p193 = scmp.lt.s32.totalorder %s11, 9
    %p194 = pnand %p192, %p193
    %p195 = pneg %p194
    // Predicated region
    $region25: #{resblock_pallas.3} parent=5 // pred_check
      _
    $region26: #{resblock_pallas.3} parent=5 // pred_check_branch
      %197 = sbr.rel (%p194) target = $region28
    $region27: #{resblock_pallas.3} parent=5 // pred_region
      %s198 = ssub.s32 %s11, 1
      %s199 = smul.u32 4, %s21
      %p200 = scmp.lt.s32.totalorder %s20, 1
      %s201 = scalar_select %p200, %s20, 1
      %p202 = scmp.lt.s32.totalorder %s199, 15
      %s203 = scalar_select %p202, %s199, 15
      %s204 = smul.addr %s203, 2
      %s205 = smul.addr %s201, 32
      %s206 = sadd.s32 %s204, %s205
      %s207 = smul.addr %s206, 4
      %s208 = scalar_lea.vmem %s0, %s207
      %p209 = pneg %p51
      %p210 = pneg %p48
      %p211 = pneg %p72
      %p212 = pneg %p69
      %p213 = pneg %p100
      %p214 = pneg %p97
      %s215 = smul.u32 4, %s21
      %p216 = scmp.lt.s32.totalorder %s20, 1
      %s217 = scalar_select %p216, %s20, 1
      %p218 = scmp.lt.s32.totalorder %s215, 15
      %s219 = scalar_select %p218, %s215, 15
      %s220 = smul.addr %s219, 2
      %s221 = smul.addr %s217, 32
      %s222 = sadd.s32 %s220, %s221
      %s223 = smul.addr %s222, 4
      %s224 = scalar_lea.vmem %s2, %s223
      %p225 = pneg %p128
      %p226 = pneg %p125
      %p227 = scmp.lt.s32.totalorder %s20, 1
      %s228 = scalar_select %p227, %s20, 1
      %p229 = scmp.lt.s32.totalorder %s21, 3
      %s230 = scalar_select %p229, %s21, 3
      %s231 = smul.addr %s228, 4
      %s232 = sadd.s32 %s230, %s231
      %s233 = smul.addr %s232, 8
      %s234 = scalar_lea.vmem %s3, %s233
      %p235 = pneg %p156
      %p236 = pneg %p153
      %p237 = scmp.lt.s32.totalorder %s20, 1
      %s238 = scalar_select %p237, %s20, 1
      %p239 = scmp.lt.s32.totalorder %s21, 3
      %s240 = scalar_select %p239, %s21, 3
      %s241 = smul.addr %s238, 4
      %s242 = sadd.s32 %s240, %s241
      %s243 = smul.addr %s242, 8
      %s244 = scalar_lea.vmem %s4, %s243
      %s245 = smul.u32 4, %s21
      %p246 = scmp.lt.s32.totalorder %s20, 1
      %s247 = scalar_select %p246, %s20, 1
      %p248 = scmp.lt.s32.totalorder %s245, 15
      %s249 = scalar_select %p248, %s245, 15
      %s250 = smul.addr %s249, 2
      %s251 = smul.addr %s247, 32
      %s252 = sadd.s32 %s250, %s251
      %s253 = smul.addr %s252, 4
      %s254 = scalar_lea.vmem %s0, %s253
      %s255 = smul.u32 4, %s21
      %s256 = smul.u32 4, %s21
      %p257 = scmp.lt.s32.totalorder %s20, 1
      %s258 = scalar_select %p257, %s20, 1
      %p259 = scmp.lt.s32.totalorder %s256, 15
      %s260 = scalar_select %p259, %s256, 15
      %s261 = smul.addr %s260, 2
      %s262 = smul.addr %s258, 32
      %s263 = sadd.s32 %s261, %s262
      %s264 = smul.addr %s263, 4
      %s265 = scalar_lea.vmem %s2, %s264
      %s266 = smul.u32 4, %s21
      %p267 = scmp.lt.s32.totalorder %s20, 1
      %s268 = scalar_select %p267, %s20, 1
      %p269 = scmp.lt.s32.totalorder %s21, 3
      %s270 = scalar_select %p269, %s21, 3
      %s271 = smul.addr %s268, 4
      %s272 = sadd.s32 %s270, %s271
      %s273 = smul.addr %s272, 8
      %s274 = scalar_lea.vmem %s3, %s273
      %p275 = scmp.lt.s32.totalorder %s20, 1
      %s276 = scalar_select %p275, %s20, 1
      %p277 = scmp.lt.s32.totalorder %s21, 3
      %s278 = scalar_select %p277, %s21, 3
      %s279 = smul.addr %s276, 4
      %s280 = sadd.s32 %s278, %s279
      %s281 = smul.addr %s280, 8
      %s282 = scalar_lea.vmem %s4, %s281
      %v284 = vld [vmem:[%s254] sm:$0xf]
      %v285 = vld [vmem:[%s254 + $0x4] sm:$0xf]
      %v286 = vld [vmem:[%s254 + $0x8] sm:$0xf]
      %v287 = vld [vmem:[%s254 + $0xc] sm:$0xf]
      %v288 = vld [vmem:[%s254 + $0x10] sm:$0xf]
      %v289 = vld [vmem:[%s254 + $0x14] sm:$0xf]
      %v290 = vld [vmem:[%s254 + $0x18] sm:$0xf]
      %v291 = vld [vmem:[%s254 + $0x1c] sm:$0xf]
      %v292 = vld [vmem:[%s1] sm:$0xf]
      %v301 = vunpack.c.l.b16 %v284
      %v302 = vunpack.c.l.b16 %v285
      %v303 = vunpack.c.l.b16 %v286
      %v304 = vunpack.c.l.b16 %v287
      %v305 = vunpack.c.l.b16 %v288
      %v306 = vunpack.c.l.b16 %v289
      %v307 = vunpack.c.l.b16 %v290
      %v308 = vunpack.c.l.b16 %v291
      %v309 = vpack.c.b16 %v302, %v301
      %v310 = vpack.c.b16 %v304, %v303
      %v311 = vpack.c.b16 %v306, %v305
      %v312 = vpack.c.b16 %v308, %v307
      %vm313 = vcmask 64512
      %v315 = vsel %vm313, %v309, 0
      %v318 = vsel %vm313, %v310, 0
      %v321 = vsel %vm313, %v311, 0
      %v324 = vsel %vm313, %v312, 0
      %vm326 = vcmask 1043456
      %v328 = vsel %vm326, %v292, 0
      %330 = vmatprep.subr.bf16.mxu0 0
      %331 = vmatpush1.bf16.msra.mxu0 %v328
      %332 = vmatprep.subr.bf16.mxu0 0
      %333 = vmatpush1.bf16.msra.mxu0 0
      %334 = vmatprep.subr.bf16.mxu0 0
      %335 = vmatpush1.bf16.msra.mxu0 0
      %336 = vmatprep.subr.bf16.mxu0 0
      %337 = vmatpush1.bf16.msra.mxu0 0
      %338 = vmatprep.subr.bf16.mxu0 0
      %339 = vmatpush1.bf16.msra.mxu0 0
      %340 = vmatprep.subr.bf16.mxu0 0
      %341 = vmatpush1.bf16.msra.mxu0 0
      %342 = vmatprep.subr.bf16.mxu0 0
      %343 = vmatpush1.bf16.msra.mxu0 0
      %344 = vmatprep.subr.bf16.mxu0 0
      %345 = vmatpush1.bf16.msra.mxu0 0
      %346 = vmatprep.subr.bf16.mxu0 0
      %347 = vmatpush1.bf16.msra.mxu0 0
      %348 = vmatprep.subr.bf16.mxu0 0
      %349 = vmatpush1.bf16.msra.mxu0 0
      %350 = vmatprep.subr.bf16.mxu0 0
      %351 = vmatpush1.bf16.msra.mxu0 0
      %352 = vmatprep.subr.bf16.mxu0 0
      %353 = vmatpush1.bf16.msra.mxu0 0
      %354 = vmatprep.subr.bf16.mxu0 0
      %355 = vmatpush1.bf16.msra.mxu0 0
      %356 = vmatprep.subr.bf16.mxu0 0
      %357 = vmatpush1.bf16.msra.mxu0 0
      %358 = vmatprep.subr.bf16.mxu0 0
      %359 = vmatpush1.bf16.msra.mxu0 0
      %360 = vmatprep.subr.bf16.mxu0 0
      %361 = vmatpush1.bf16.msra.mxu0 0
      %362 = vmatprep.mubr.bf16.mxu0 0
      %363 = vmatmul.mubr.bf16.gmra.mrb[0].mxu0 %v315
      %v364 = vpop.f32.mrb[0].mxu0
      %v365 = vadd.f32 0.0, %v364
      %v366 = vpop.f32.mrb[0].mxu0
      %v367 = vpop.f32.mrb[0].mxu0
      %v368 = vadd.f32 0.0, %v367
      %v369 = vpop.f32.mrb[0].mxu0
      %370 = vmatprep.mubr.bf16.mxu0 0
      %371 = vmatmul.mubr.bf16.gmra.mrb[0].mxu0 %v318
      %v372 = vpop.f32.mrb[0].mxu0
      %v373 = vadd.f32 0.0, %v372
      %v374 = vpop.f32.mrb[0].mxu0
      %v375 = vpop.f32.mrb[0].mxu0
      %v376 = vadd.f32 0.0, %v375
      %v377 = vpop.f32.mrb[0].mxu0
      %378 = vmatprep.mubr.bf16.mxu0 0
      %379 = vmatmul.mubr.bf16.gmra.mrb[0].mxu0 %v321
      %v380 = vpop.f32.mrb[0].mxu0
      %v381 = vadd.f32 0.0, %v380
      %v382 = vpop.f32.mrb[0].mxu0
      %v383 = vpop.f32.mrb[0].mxu0
      %v384 = vadd.f32 0.0, %v383
      %v385 = vpop.f32.mrb[0].mxu0
      %386 = vmatprep.mubr.bf16.mxu0 0
      %387 = vmatmul.mubr.bf16.gmra.mrb[0].mxu0 %v324
      %v388 = vpop.f32.mrb[0].mxu0
      %v389 = vadd.f32 0.0, %v388
      %v390 = vpop.f32.mrb[0].mxu0
      %v391 = vpop.f32.mrb[0].mxu0
      %v392 = vadd.f32 0.0, %v391
      %v393 = vpop.f32.mrb[0].mxu0
      %394 = vdwg.mxu0
      %v395 = vpack.c.bf16 %v368, %v365
      %v396 = vpack.c.bf16 %v376, %v373
      %v397 = vpack.c.bf16 %v384, %v381
      %v398 = vpack.c.bf16 %v392, %v389
      %v403 = vunpack.c.l.b16 %v395
      %v404 = vunpack.c.h.b16 %v395
      %v405 = vunpack.c.l.b16 %v396
      %v406 = vunpack.c.h.b16 %v396
      %v407 = vunpack.c.l.b16 %v397
      %v408 = vunpack.c.h.b16 %v397
      %v409 = vunpack.c.l.b16 %v398
      %v410 = vunpack.c.h.b16 %v398
      %v411 = vpack.c.b16 %v403, %v403
      %v412 = vpack.c.b16 %v404, %v404
      %v413 = vpack.c.b16 %v405, %v405
      %v414 = vpack.c.b16 %v406, %v406
      %v415 = vpack.c.b16 %v407, %v407
      %v416 = vpack.c.b16 %v408, %v408
      %v417 = vpack.c.b16 %v409, %v409
      %v418 = vpack.c.b16 %v410, %v410
      %vm427 = vcmask 27648
      %428 = vst.msk [vmem:[%s265] sm:$0xf] %vm427, %v411
      %429 = vst.msk [vmem:[%s265 + $0x4] sm:$0xf] %vm427, %v412
      %430 = vst.msk [vmem:[%s265 + $0x8] sm:$0xf] %vm427, %v413
      %431 = vst.msk [vmem:[%s265 + $0xc] sm:$0xf] %vm427, %v414
      %432 = vst.msk [vmem:[%s265 + $0x10] sm:$0xf] %vm427, %v415
      %433 = vst.msk [vmem:[%s265 + $0x14] sm:$0xf] %vm427, %v416
      %434 = vst.msk [vmem:[%s265 + $0x18] sm:$0xf] %vm427, %v417
      %435 = vst.msk [vmem:[%s265 + $0x1c] sm:$0xf] %vm427, %v418
      %vm436 = vcmask 31744
      %v437 = vsel %vm436, %v365, 0.0
      %v438 = vsel %vm436, %v368, 0.0
      %v439 = vadd.f32 %v437, %v438
      %v440 = vsel %vm436, %v373, 0.0
      %v441 = vadd.f32 %v439, %v440
      %v442 = vsel %vm436, %v376, 0.0
      %v443 = vadd.f32 %v441, %v442
      %v444 = vsel %vm436, %v381, 0.0
      %v445 = vadd.f32 %v443, %v444
      %v446 = vsel %vm436, %v384, 0.0
      %v447 = vadd.f32 %v445, %v446
      %v448 = vsel %vm436, %v389, 0.0
      %v449 = vadd.f32 %v447, %v448
      %v450 = vsel %vm436, %v392, 0.0
      %v451 = vadd.f32 %v449, %v450
      %v452 = vrot.slane %v451, 4
      %v453 = vadd.f32 %v451, %v452
      %v454 = vrot.slane %v453, 2
      %v455 = vadd.f32 %v453, %v454
      %v456 = vrot.slane %v455, 1
      %v457 = vadd.f32 %v455, %v456
      %458 = vst.msk [vmem:[%s274] sm:$0xff] %vm436, %v457
      %v459 = vmul.f32 %v365, %v365
      %v460 = vmul.f32 %v368, %v368
      %v461 = vmul.f32 %v373, %v373
      %v462 = vmul.f32 %v376, %v376
      %v463 = vmul.f32 %v381, %v381
      %v464 = vmul.f32 %v384, %v384
      %v465 = vmul.f32 %v389, %v389
      %v466 = vmul.f32 %v392, %v392
      %v467 = vsel %vm436, %v459, 0.0
      %v468 = vsel %vm436, %v460, 0.0
      %v469 = vadd.f32 %v467, %v468
      %v470 = vsel %vm436, %v461, 0.0
      %v471 = vadd.f32 %v469, %v470
      %v472 = vsel %vm436, %v462, 0.0
      %v473 = vadd.f32 %v471, %v472
      %v474 = vsel %vm436, %v463, 0.0
      %v475 = vadd.f32 %v473, %v474
      %v476 = vsel %vm436, %v464, 0.0
      %v477 = vadd.f32 %v475, %v476
      %v478 = vsel %vm436, %v465, 0.0
      %v479 = vadd.f32 %v477, %v478
      %v480 = vsel %vm436, %v466, 0.0
      %v481 = vadd.f32 %v479, %v480
      %v482 = vrot.slane %v481, 4
      %v483 = vadd.f32 %v481, %v482
      %v484 = vrot.slane %v483, 2
      %v485 = vadd.f32 %v483, %v484
      %v486 = vrot.slane %v485, 1
      %v487 = vadd.f32 %v485, %v486
      %488 = vst.msk [vmem:[%s282] sm:$0xff] %vm436, %v487
      %s489 = smul.u32 4, %s21
      %p490 = scmp.lt.s32.totalorder %s20, 1
      %s491 = scalar_select %p490, %s20, 1
      %p492 = scmp.lt.s32.totalorder %s489, 15
      %s493 = scalar_select %p492, %s489, 15
      %s494 = smul.addr %s493, 2
      %s495 = smul.addr %s491, 32
      %s496 = sadd.s32 %s494, %s495
      %s497 = smul.addr %s496, 4
      %s498 = scalar_lea.vmem %s2, %s497
      %p499 = scmp.lt.s32.totalorder %s20, 1
      %s500 = scalar_select %p499, %s20, 1
      %p501 = scmp.lt.s32.totalorder %s21, 3
      %s502 = scalar_select %p501, %s21, 3
      %s503 = smul.addr %s500, 4
      %s504 = sadd.s32 %s502, %s503
      %s505 = smul.addr %s504, 8
      %s506 = scalar_lea.vmem %s3, %s505
      %p507 = scmp.lt.s32.totalorder %s20, 1
      %s508 = scalar_select %p507, %s20, 1
      %p509 = scmp.lt.s32.totalorder %s21, 3
      %s510 = scalar_select %p509, %s21, 3
      %s511 = smul.addr %s508, 4
      %s512 = sadd.s32 %s510, %s511
      %s513 = smul.addr %s512, 8
      %s514 = scalar_lea.vmem %s4, %s513
      // Predicated region
      $region29: #{resblock_pallas.3} parent=27 // pred_check
        %p515 = pneg %p97
      $region30: #{resblock_pallas.3} parent=27 // pred_check_branch
        %517 = sbr.rel (%p515) target = $region32
      $region31: #{resblock_pallas.3} parent=27 // pred_region
        %s518 = smul.u32 4, %s21
      $region32: #{resblock_pallas.3} parent=27 // pred_fallthru
        _
      // Predicated region
      $region33: #{resblock_pallas.3} parent=27 // pred_check
        %p519 = pneg %p125
      $region34: #{resblock_pallas.3} parent=27 // pred_check_branch
        %521 = sbr.rel (%p519) target = $region36
      $region35: #{resblock_pallas.3} parent=27 // pred_region
        _
      $region36: #{resblock_pallas.3} parent=27 // pred_fallthru
        _
      // Predicated region
      $region37: #{resblock_pallas.3} parent=27 // pred_check
        %p522 = pneg %p153
      $region38: #{resblock_pallas.3} parent=27 // pred_check_branch
        %524 = sbr.rel (%p522) target = $region40
      $region39: #{resblock_pallas.3} parent=27 // pred_region
        _
      $region40: #{resblock_pallas.3} parent=27 // pred_fallthru
        _
    $region28: #{resblock_pallas.3} parent=5 // pred_fallthru
      _
    %p525 = scmp.le.s32.totalorder 2, %s11
    // Predicated region
    $region41: #{resblock_pallas.3} parent=5 // pred_check
      %p526 = pneg %p525
    $region42: #{resblock_pallas.3} parent=5 // pred_check_branch
      %528 = sbr.rel (%p526) target = $region44
    $region43: #{resblock_pallas.3} parent=5 // pred_region
      %s529 = ssub.s32 %s11, 2
      // Predicated region
      $region45: #{resblock_pallas.3} parent=43 // pred_check
        %p530 = pneg %p103
      $region46: #{resblock_pallas.3} parent=43 // pred_check_branch
        %532 = sbr.rel (%p530) target = $region48
      $region47: #{resblock_pallas.3} parent=43 // pred_region
        %s533 = smul.u32 4, %s23
        %p534 = scmp.lt.s32.totalorder %s22, 1
        %s535 = scalar_select %p534, %s22, 1
        %p536 = scmp.lt.s32.totalorder %s533, 15
        %s537 = scalar_select %p536, %s533, 15
        %s538 = smul.addr %s537, 2
        %s539 = smul.addr %s535, 32
        %s540 = sadd.s32 %s538, %s539
        %s541 = smul.addr %s540, 4
        %s542 = scalar_lea.vmem %s2, %s541
      $region48: #{resblock_pallas.3} parent=43 // pred_fallthru
        _
      // Predicated region
      $region49: #{resblock_pallas.3} parent=43 // pred_check
        %p543 = pneg %p131
      $region50: #{resblock_pallas.3} parent=43 // pred_check_branch
        %545 = sbr.rel (%p543) target = $region52
      $region51: #{resblock_pallas.3} parent=43 // pred_region
        %p546 = scmp.lt.s32.totalorder %s22, 1
        %s547 = scalar_select %p546, %s22, 1
        %p548 = scmp.lt.s32.totalorder %s23, 3
        %s549 = scalar_select %p548, %s23, 3
        %s550 = smul.addr %s547, 4
        %s551 = sadd.s32 %s549, %s550
        %s552 = smul.addr %s551, 8
        %s553 = scalar_lea.vmem %s3, %s552
      $region52: #{resblock_pallas.3} parent=43 // pred_fallthru
        _
      // Predicated region
      $region53: #{resblock_pallas.3} parent=43 // pred_check
        %p554 = pneg %p159
      $region54: #{resblock_pallas.3} parent=43 // pred_check_branch
        %556 = sbr.rel (%p554) target = $region56
      $region55: #{resblock_pallas.3} parent=43 // pred_region
        %p557 = scmp.lt.s32.totalorder %s22, 1
        %s558 = scalar_select %p557, %s22, 1
        %p559 = scmp.lt.s32.totalorder %s23, 3
        %s560 = scalar_select %p559, %s23, 3
        %s561 = smul.addr %s558, 4
        %s562 = sadd.s32 %s560, %s561
        %s563 = smul.addr %s562, 8
        %s564 = scalar_lea.vmem %s4, %s563
      $region56: #{resblock_pallas.3} parent=43 // pred_fallthru
        _
    $region44: #{resblock_pallas.3} parent=5 // pred_fallthru
      _
  $region6: #{resblock_pallas.3} parent=0 // loop_footer
    %s15 = sadd.s32 1, %s11
  $region7: #{resblock_pallas.3} parent=0 // loop_footer_branch
    %10 = sbr.rel target = $region3
  $region8: #{resblock_pallas.3} parent=0 // loop_exit
    _

// kernel: resblock_pallas.5
$region0: #{resblock_pallas.5}
  #allocation0 [shape = 'u32[]', space=smem, size = 0x4, offset = 0x4, fixed_abs, tag = 'smem constant byte address 0x4 - core index']
  #allocation1 [shape = 'u32[144,128]{1,0:T(1,128)}', space=vmem, size = 0x12000, scoped, tag = 'internal scratch']
  %s0 = inlined_call_operand.vmem [shape: bf16[2,16,16,8], index: 0, kind: input, shape index: {}]
  %s1 = inlined_call_operand.vmem [shape: f32[2,16,16,8], index: 1, kind: input, shape index: {}]
  %s2 = inlined_call_operand.vmem [shape: f32[1,8], index: 2, kind: input, shape index: {}]
  %s3 = inlined_call_operand.vmem [shape: f32[1,8], index: 3, kind: input, shape index: {}]
  %s4 = inlined_call_operand.vmem [shape: f32[2,16,16,8], index: 4, kind: output, shape index: {}]
  %s5 = sld [smem:[#allocation0]]
  $region49: #{resblock_pallas.5} parent=0
    _
  %s7 = ssub.s32 1, %s5
  %s8 = scalar_select 0, %s7, %s5
  loop: start=0, step=1, limit=10
  $region2: #{resblock_pallas.5} parent=0 // loop_pre_header
    _
  $region3: #{resblock_pallas.5} parent=0 // loop_header
    %s10 = sphi 0, %s14
    %p11 = scmp.ge.s32.totalorder %s10, 10
    %s17 = sphi 0, %s29
    %s18 = sphi 0, %s25
    %s19 = sphi 0, %s17
    %s20 = sphi 0, %s18
    %s21 = sphi 0, %s19
    %s22 = sphi 0, %s20
    %s34 = sphi 0, %s36
    %s37 = sphi 0, %s34
    %s38 = sphi 0, %s37
    %s54 = sphi 0, %s38
    %s62 = sphi 0, %s64
    %s65 = sphi 0, %s62
    %s66 = sphi 0, %s65
    %s82 = sphi 0, %s66
    %s86 = sphi 0, %s86
    %s88 = sphi 0, %s86
    %s89 = sphi 0, %s88
    %s103 = sphi 0, %s89
    %s107 = sphi 0, %s107
    %s109 = sphi 0, %s107
    %s110 = sphi 0, %s109
    %s124 = sphi 0, %s110
    %s132 = sphi 0, %s134
    %s135 = sphi 0, %s132
    %s136 = sphi 0, %s135
    %s152 = sphi 0, %s136
  $region4: #{resblock_pallas.5} parent=0 // loop_header_branch
    %13 = sbr.rel (%p11) target = $region8
  $region5: #{resblock_pallas.5} parent=0 // loop_body
    %s15 = ssub.s32 %s10, 1
    %s16 = ssub.s32 %s10, 2
    %s23 = sadd.s32 1, %s18
    %p24 = scmp.ge.s32.totalorder %s23, 4
    %s25 = scalar_select %p24, 0, %s23
    %s26 = sadd.s32 1, %s17
    %s27 = scalar_select %p24, %s26, %s17
    %p28 = scmp.ge.s32.totalorder %s27, 2
    %s29 = scalar_select %p28, 0, %s27
    %s30 = ssub.s32 %s17, %s29
    %s31 = ssub.s32 %s18, %s25
    %s32 = sor.u32 %s30, %s31
    %p33 = scmp.eq.s32.totalorder %s32, 0
    %s35 = sadd.s32 %s34, 1
    %s36 = scalar_select %p33, %s34, %s35
    %p39 = pneg %p33
    %p40 = scmp.eq.s32.totalorder %s10, 7
    %p41 = por %p39, %p40
    %p42 = scmp.ne.s32.totalorder %s34, %s37
    %p43 = scmp.eq.s32.totalorder %s10, 0
    %p44 = por %p42, %p43
    %p45 = scmp.ne.s32.totalorder %s34, %s37
    %p46 = scmp.eq.s32.totalorder %s15, 7
    %p47 = por %p45, %p46
    %p48 = scmp.ne.s32.totalorder %s37, %s38
    %p49 = scmp.eq.s32.totalorder %s15, 0
    %p50 = por %p48, %p49
    %p51 = scmp.ne.s32.totalorder %s37, %s38
    %p52 = scmp.eq.s32.totalorder %s16, 7
    %p53 = por %p51, %p52
    %p55 = scmp.ne.s32.totalorder %s38, %s54
    %p56 = scmp.eq.s32.totalorder %s16, 0
    %p57 = por %p55, %p56
    %s58 = ssub.s32 %s17, %s29
    %s59 = ssub.s32 %s18, %s25
    %s60 = sor.u32 %s58, %s59
    %p61 = scmp.eq.s32.totalorder %s60, 0
    %s63 = sadd.s32 %s62, 1
    %s64 = scalar_select %p61, %s62, %s63
    %p67 = pneg %p61
    %p68 = scmp.eq.s32.totalorder %s10, 7
    %p69 = por %p67, %p68
    %p70 = scmp.ne.s32.totalorder %s62, %s65
    %p71 = scmp.eq.s32.totalorder %s10, 0
    %p72 = por %p70, %p71
    %p73 = scmp.ne.s32.totalorder %s62, %s65
    %p74 = scmp.eq.s32.totalorder %s15, 7
    %p75 = por %p73, %p74
    %p76 = scmp.ne.s32.totalorder %s65, %s66
    %p77 = scmp.eq.s32.totalorder %s15, 0
    %p78 = por %p76, %p77
    %p79 = scmp.ne.s32.totalorder %s65, %s66
    %p80 = scmp.eq.s32.totalorder %s16, 7
    %p81 = por %p79, %p80
    %p83 = scmp.ne.s32.totalorder %s66, %s82
    %p84 = scmp.eq.s32.totalorder %s16, 0
    %p85 = por %p83, %p84
    %s87 = sadd.s32 %s86, 1
    %p90 = scmp.eq.s32.totalorder %s10, 7
    %p91 = scmp.ne.s32.totalorder %s86, %s88
    %p92 = scmp.eq.s32.totalorder %s10, 0
    %p93 = por %p91, %p92
    %p94 = scmp.ne.s32.totalorder %s86, %s88
    %p95 = scmp.eq.s32.totalorder %s15, 7
    %p96 = por %p94, %p95
    %p97 = scmp.ne.s32.totalorder %s88, %s89
    %p98 = scmp.eq.s32.totalorder %s15, 0
    %p99 = por %p97, %p98
    %p100 = scmp.ne.s32.totalorder %s88, %s89
    %p101 = scmp.eq.s32.totalorder %s16, 7
    %p102 = por %p100, %p101
    %p104 = scmp.ne.s32.totalorder %s89, %s103
    %p105 = scmp.eq.s32.totalorder %s16, 0
    %p106 = por %p104, %p105
    %s108 = sadd.s32 %s107, 1
    %p111 = scmp.eq.s32.totalorder %s10, 7
    %p112 = scmp.ne.s32.totalorder %s107, %s109
    %p113 = scmp.eq.s32.totalorder %s10, 0
    %p114 = por %p112, %p113
    %p115 = scmp.ne.s32.totalorder %s107, %s109
    %p116 = scmp.eq.s32.totalorder %s15, 7
    %p117 = por %p115, %p116
    %p118 = scmp.ne.s32.totalorder %s109, %s110
    %p119 = scmp.eq.s32.totalorder %s15, 0
    %p120 = por %p118, %p119
    %p121 = scmp.ne.s32.totalorder %s109, %s110
    %p122 = scmp.eq.s32.totalorder %s16, 7
    %p123 = por %p121, %p122
    %p125 = scmp.ne.s32.totalorder %s110, %s124
    %p126 = scmp.eq.s32.totalorder %s16, 0
    %p127 = por %p125, %p126
    %s128 = ssub.s32 %s17, %s29
    %s129 = ssub.s32 %s18, %s25
    %s130 = sor.u32 %s128, %s129
    %p131 = scmp.eq.s32.totalorder %s130, 0
    %s133 = sadd.s32 %s132, 1
    %s134 = scalar_select %p131, %s132, %s133
    %p137 = pneg %p131
    %p138 = scmp.eq.s32.totalorder %s10, 7
    %p139 = por %p137, %p138
    %p140 = scmp.ne.s32.totalorder %s132, %s135
    %p141 = scmp.eq.s32.totalorder %s10, 0
    %p142 = por %p140, %p141
    %p143 = scmp.ne.s32.totalorder %s132, %s135
    %p144 = scmp.eq.s32.totalorder %s15, 7
    %p145 = por %p143, %p144
    %p146 = scmp.ne.s32.totalorder %s135, %s136
    %p147 = scmp.eq.s32.totalorder %s15, 0
    %p148 = por %p146, %p147
    %p149 = scmp.ne.s32.totalorder %s135, %s136
    %p150 = scmp.eq.s32.totalorder %s16, 7
    %p151 = por %p149, %p150
    %p153 = scmp.ne.s32.totalorder %s136, %s152
    %p154 = scmp.eq.s32.totalorder %s16, 0
    %p155 = por %p153, %p154
    %p156 = scmp.le.s32.totalorder 1, %s10
    %p157 = scmp.lt.s32.totalorder %s10, 9
    %p158 = pnand %p156, %p157
    %p159 = pneg %p158
    // Predicated region
    $region9: #{resblock_pallas.5} parent=5 // pred_check
      _
    $region10: #{resblock_pallas.5} parent=5 // pred_check_branch
      %161 = sbr.rel (%p158) target = $region12
    $region11: #{resblock_pallas.5} parent=5 // pred_region
      %s162 = ssub.s32 %s10, 1
      // Predicated region
      $region13: #{resblock_pallas.5} parent=11 // pred_check
        %p163 = pneg %p99
      $region14: #{resblock_pallas.5} parent=11 // pred_check_branch
        %165 = sbr.rel (%p163) target = $region16
      $region15: #{resblock_pallas.5} parent=11 // pred_region
        _
      $region16: #{resblock_pallas.5} parent=11 // pred_fallthru
        _
      // Predicated region
      $region17: #{resblock_pallas.5} parent=11 // pred_check
        %p166 = pneg %p120
      $region18: #{resblock_pallas.5} parent=11 // pred_check_branch
        %168 = sbr.rel (%p166) target = $region20
      $region19: #{resblock_pallas.5} parent=11 // pred_region
        _
      $region20: #{resblock_pallas.5} parent=11 // pred_fallthru
        _
    $region12: #{resblock_pallas.5} parent=5 // pred_fallthru
      _
    %p169 = scmp.lt.s32.totalorder %s10, 8
    // Predicated region
    $region21: #{resblock_pallas.5} parent=5 // pred_check
      %p170 = pneg %p169
    $region22: #{resblock_pallas.5} parent=5 // pred_check_branch
      %172 = sbr.rel (%p170) target = $region24
    $region23: #{resblock_pallas.5} parent=5 // pred_region
      // Predicated region
      $region25: #{resblock_pallas.5} parent=23 // pred_check
        %p173 = pneg %p44
      $region26: #{resblock_pallas.5} parent=23 // pred_check_branch
        %175 = sbr.rel (%p173) target = $region28
      $region27: #{resblock_pallas.5} parent=23 // pred_region
        %s176 = smul.u32 4, %s18
        %p177 = scmp.lt.s32.totalorder %s17, 1
        %s178 = scalar_select %p177, %s17, 1
        %p179 = scmp.lt.s32.totalorder %s176, 15
        %s180 = scalar_select %p179, %s176, 15
        %s181 = smul.addr %s180, 2
        %s182 = smul.addr %s178, 32
        %s183 = sadd.s32 %s181, %s182
        %s184 = smul.addr %s183, 4
        %s185 = scalar_lea.vmem %s0, %s184
        %s186 = smul.u32 4, %s18
      $region28: #{resblock_pallas.5} parent=23 // pred_fallthru
        _
      // Predicated region
      $region29: #{resblock_pallas.5} parent=23 // pred_check
        %p187 = pneg %p72
      $region30: #{resblock_pallas.5} parent=23 // pred_check_branch
        %189 = sbr.rel (%p187) target = $region32
      $region31: #{resblock_pallas.5} parent=23 // pred_region
        %s190 = smul.u32 4, %s18
        %p191 = scmp.lt.s32.totalorder %s17, 1
        %s192 = scalar_select %p191, %s17, 1
        %p193 = scmp.lt.s32.totalorder %s190, 15
        %s194 = scalar_select %p193, %s190, 15
        %s195 = smul.addr %s194, 2
        %s196 = smul.addr %s192, 32
        %s197 = sadd.s32 %s195, %s196
        %s198 = smul.addr %s197, 8
        %s199 = scalar_lea.vmem %s1, %s198
        %s200 = smul.u32 4, %s18
      $region32: #{resblock_pallas.5} parent=23 // pred_fallthru
        _
    $region24: #{resblock_pallas.5} parent=5 // pred_fallthru
      _
    %p201 = scmp.le.s32.totalorder 1, %s10
    %p202 = scmp.lt.s32.totalorder %s10, 9
    %p203 = pnand %p201, %p202
    %p204 = pneg %p203
    // Predicated region
    $region33: #{resblock_pallas.5} parent=5 // pred_check
      _
    $region34: #{resblock_pallas.5} parent=5 // pred_check_branch
      %206 = sbr.rel (%p203) target = $region36
    $region35: #{resblock_pallas.5} parent=5 // pred_region
      %s207 = ssub.s32 %s10, 1
      %s208 = smul.u32 4, %s20
      %p209 = scmp.lt.s32.totalorder %s19, 1
      %s210 = scalar_select %p209, %s19, 1
      %p211 = scmp.lt.s32.totalorder %s208, 15
      %s212 = scalar_select %p211, %s208, 15
      %s213 = smul.addr %s212, 2
      %s214 = smul.addr %s210, 32
      %s215 = sadd.s32 %s213, %s214
      %s216 = smul.addr %s215, 4
      %s217 = scalar_lea.vmem %s0, %s216
      %p218 = pneg %p50
      %p219 = pneg %p47
      %s220 = smul.u32 4, %s20
      %p221 = scmp.lt.s32.totalorder %s19, 1
      %s222 = scalar_select %p221, %s19, 1
      %p223 = scmp.lt.s32.totalorder %s220, 15
      %s224 = scalar_select %p223, %s220, 15
      %s225 = smul.addr %s224, 2
      %s226 = smul.addr %s222, 32
      %s227 = sadd.s32 %s225, %s226
      %s228 = smul.addr %s227, 8
      %s229 = scalar_lea.vmem %s1, %s228
      %p230 = pneg %p78
      %p231 = pneg %p75
      %p232 = pneg %p99
      %p233 = pneg %p96
      %p234 = pneg %p120
      %p235 = pneg %p117
      %p236 = pneg %p148
      %p237 = pneg %p145
      %s238 = smul.u32 4, %s20
      %p239 = scmp.lt.s32.totalorder %s19, 1
      %s240 = scalar_select %p239, %s19, 1
      %p241 = scmp.lt.s32.totalorder %s238, 15
      %s242 = scalar_select %p241, %s238, 15
      %s243 = smul.addr %s242, 2
      %s244 = smul.addr %s240, 32
      %s245 = sadd.s32 %s243, %s244
      %s246 = smul.addr %s245, 8
      %s247 = scalar_lea.vmem %s4, %s246
      %s248 = smul.u32 4, %s20
      %p249 = scmp.lt.s32.totalorder %s19, 1
      %s250 = scalar_select %p249, %s19, 1
      %p251 = scmp.lt.s32.totalorder %s248, 15
      %s252 = scalar_select %p251, %s248, 15
      %s253 = smul.addr %s252, 2
      %s254 = smul.addr %s250, 32
      %s255 = sadd.s32 %s253, %s254
      %s256 = smul.addr %s255, 4
      %s257 = scalar_lea.vmem %s0, %s256
      %s258 = smul.u32 4, %s20
      %s259 = smul.u32 4, %s20
      %p260 = scmp.lt.s32.totalorder %s19, 1
      %s261 = scalar_select %p260, %s19, 1
      %p262 = scmp.lt.s32.totalorder %s259, 15
      %s263 = scalar_select %p262, %s259, 15
      %s264 = smul.addr %s263, 2
      %s265 = smul.addr %s261, 32
      %s266 = sadd.s32 %s264, %s265
      %s267 = smul.addr %s266, 8
      %s268 = scalar_lea.vmem %s1, %s267
      %s269 = smul.u32 4, %s20
      %s270 = smul.u32 4, %s20
      %p271 = scmp.lt.s32.totalorder %s19, 1
      %s272 = scalar_select %p271, %s19, 1
      %p273 = scmp.lt.s32.totalorder %s270, 15
      %s274 = scalar_select %p273, %s270, 15
      %s275 = smul.addr %s274, 2
      %s276 = smul.addr %s272, 32
      %s277 = sadd.s32 %s275, %s276
      %s278 = smul.addr %s277, 8
      %s279 = scalar_lea.vmem %s4, %s278
      %s280 = smul.u32 4, %s20
      %v281 = vld [vmem:[%s257] sm:$0xf]
      %v282 = vld [vmem:[%s257 + $0x4] sm:$0xf]
      %v283 = vld [vmem:[%s257 + $0x8] sm:$0xf]
      %v284 = vld [vmem:[%s257 + $0xc] sm:$0xf]
      %v285 = vld [vmem:[%s257 + $0x10] sm:$0xf]
      %v286 = vld [vmem:[%s257 + $0x14] sm:$0xf]
      %v287 = vld [vmem:[%s257 + $0x18] sm:$0xf]
      %v288 = vld [vmem:[%s257 + $0x1c] sm:$0xf]
      %v289 = vunpack.c.l.bf16 %v281
      %v290 = vunpack.c.l.bf16 %v282
      %v291 = vunpack.c.l.bf16 %v283
      %v292 = vunpack.c.l.bf16 %v284
      %v293 = vunpack.c.l.bf16 %v285
      %v294 = vunpack.c.l.bf16 %v286
      %v295 = vunpack.c.l.bf16 %v287
      %v296 = vunpack.c.l.bf16 %v288
      %v297 = vld [vmem:[%s2] sm:$0x1]
      %v299 = vlaneseq
      %v300 = vshrl.u32 %v299, 7
      %v301 = vsub.s32 0, %v300
      %v302 = vrot.slane %v297, %v301
      %v304 = vmul.f32 %v289, %v302
      %v305 = vmul.f32 %v290, %v302
      %v306 = vmul.f32 %v291, %v302
      %v307 = vmul.f32 %v292, %v302
      %v308 = vmul.f32 %v293, %v302
      %v309 = vmul.f32 %v294, %v302
      %v310 = vmul.f32 %v295, %v302
      %v311 = vmul.f32 %v296, %v302
      %v312 = vld [vmem:[%s3] sm:$0x1]
      %v314 = vlaneseq
      %v315 = vshrl.u32 %v314, 7
      %v316 = vsub.s32 0, %v315
      %v317 = vrot.slane %v312, %v316
      %v319 = vadd.f32 %v304, %v317
      %v320 = vadd.f32 %v305, %v317
      %v321 = vadd.f32 %v306, %v317
      %v322 = vadd.f32 %v307, %v317
      %v323 = vadd.f32 %v308, %v317
      %v324 = vadd.f32 %v309, %v317
      %v325 = vadd.f32 %v310, %v317
      %v326 = vadd.f32 %v311, %v317
      %vm327 = vcmp.gt.f32.partialorder %v319, 0.0
      %vm328 = vcmp.gt.f32.partialorder %v320, 0.0
      %vm329 = vcmp.gt.f32.partialorder %v321, 0.0
      %vm330 = vcmp.gt.f32.partialorder %v322, 0.0
      %vm331 = vcmp.gt.f32.partialorder %v323, 0.0
      %vm332 = vcmp.gt.f32.partialorder %v324, 0.0
      %vm333 = vcmp.gt.f32.partialorder %v325, 0.0
      %vm334 = vcmp.gt.f32.partialorder %v326, 0.0
      %v335 = vmul.f32 %v319, 0.1
      %v336 = vmul.f32 %v320, 0.1
      %v337 = vmul.f32 %v321, 0.1
      %v338 = vmul.f32 %v322, 0.1
      %v339 = vmul.f32 %v323, 0.1
      %v340 = vmul.f32 %v324, 0.1
      %v341 = vmul.f32 %v325, 0.1
      %v342 = vmul.f32 %v326, 0.1
      %v343 = vsel %vm327, %v319, %v335
      %v344 = vsel %vm328, %v320, %v336
      %v345 = vsel %vm329, %v321, %v337
      %v346 = vsel %vm330, %v322, %v338
      %v347 = vsel %vm331, %v323, %v339
      %v348 = vsel %vm332, %v324, %v340
      %v349 = vsel %vm333, %v325, %v341
      %v350 = vsel %vm334, %v326, %v342
      %v351 = vld [vmem:[%s268] sm:$0xff]
      %v352 = vld [vmem:[%s268 + $0x8] sm:$0xff]
      %v353 = vld [vmem:[%s268 + $0x10] sm:$0xff]
      %v354 = vld [vmem:[%s268 + $0x18] sm:$0xff]
      %v355 = vld [vmem:[%s268 + $0x20] sm:$0xff]
      %v356 = vld [vmem:[%s268 + $0x28] sm:$0xff]
      %v357 = vld [vmem:[%s268 + $0x30] sm:$0xff]
      %v358 = vld [vmem:[%s268 + $0x38] sm:$0xff]
      %v359 = vadd.f32 %v343, %v351
      %v360 = vadd.f32 %v344, %v352
      %v361 = vadd.f32 %v345, %v353
      %v362 = vadd.f32 %v346, %v354
      %v363 = vadd.f32 %v347, %v355
      %v364 = vadd.f32 %v348, %v356
      %v365 = vadd.f32 %v349, %v357
      %v366 = vadd.f32 %v350, %v358
      %vm367 = vcmask 64512
      %368 = vst.msk [vmem:[%s279] sm:$0xff] %vm367, %v359
      %369 = vst.msk [vmem:[%s279 + $0x8] sm:$0xff] %vm367, %v360
      %370 = vst.msk [vmem:[%s279 + $0x10] sm:$0xff] %vm367, %v361
      %371 = vst.msk [vmem:[%s279 + $0x18] sm:$0xff] %vm367, %v362
      %372 = vst.msk [vmem:[%s279 + $0x20] sm:$0xff] %vm367, %v363
      %373 = vst.msk [vmem:[%s279 + $0x28] sm:$0xff] %vm367, %v364
      %374 = vst.msk [vmem:[%s279 + $0x30] sm:$0xff] %vm367, %v365
      %375 = vst.msk [vmem:[%s279 + $0x38] sm:$0xff] %vm367, %v366
      %s376 = smul.u32 4, %s20
      %p377 = scmp.lt.s32.totalorder %s19, 1
      %s378 = scalar_select %p377, %s19, 1
      %p379 = scmp.lt.s32.totalorder %s376, 15
      %s380 = scalar_select %p379, %s376, 15
      %s381 = smul.addr %s380, 2
      %s382 = smul.addr %s378, 32
      %s383 = sadd.s32 %s381, %s382
      %s384 = smul.addr %s383, 8
      %s385 = scalar_lea.vmem %s4, %s384
      // Predicated region
      $region37: #{resblock_pallas.5} parent=35 // pred_check
        %p386 = pneg %p145
      $region38: #{resblock_pallas.5} parent=35 // pred_check_branch
        %388 = sbr.rel (%p386) target = $region40
      $region39: #{resblock_pallas.5} parent=35 // pred_region
        %s389 = smul.u32 4, %s20
      $region40: #{resblock_pallas.5} parent=35 // pred_fallthru
        _
    $region36: #{resblock_pallas.5} parent=5 // pred_fallthru
      _
    %p390 = scmp.le.s32.totalorder 2, %s10
    // Predicated region
    $region41: #{resblock_pallas.5} parent=5 // pred_check
      %p391 = pneg %p390
    $region42: #{resblock_pallas.5} parent=5 // pred_check_branch
      %393 = sbr.rel (%p391) target = $region44
    $region43: #{resblock_pallas.5} parent=5 // pred_region
      %s394 = ssub.s32 %s10, 2
      // Predicated region
      $region45: #{resblock_pallas.5} parent=43 // pred_check
        %p395 = pneg %p151
      $region46: #{resblock_pallas.5} parent=43 // pred_check_branch
        %397 = sbr.rel (%p395) target = $region48
      $region47: #{resblock_pallas.5} parent=43 // pred_region
        %s398 = smul.u32 4, %s22
        %p399 = scmp.lt.s32.totalorder %s21, 1
        %s400 = scalar_select %p399, %s21, 1
        %p401 = scmp.lt.s32.totalorder %s398, 15
        %s402 = scalar_select %p401, %s398, 15
        %s403 = smul.addr %s402, 2
        %s404 = smul.addr %s400, 32
        %s405 = sadd.s32 %s403, %s404
        %s406 = smul.addr %s405, 8
        %s407 = scalar_lea.vmem %s4, %s406
      $region48: #{resblock_pallas.5} parent=43 // pred_fallthru
        _
    $region44: #{resblock_pallas.5} parent=5 // pred_fallthru
      _
  $region6: #{resblock_pallas.5} parent=0 // loop_footer
    %s14 = sadd.s32 1, %s10
  $region7: #{resblock_pallas.5} parent=0 // loop_footer_branch
    %9 = sbr.rel target = $region3
  $region8: #{resblock_pallas.5} parent=0 // loop_exit
    _

// kernel: resblock_pallas.4
$region0: #{resblock_pallas.4}
  #allocation0 [shape = 'u32[]', space=smem, size = 0x4, offset = 0x4, fixed_abs, tag = 'smem constant byte address 0x4 - core index']
  #allocation1 [shape = 'u32[144,128]{1,0:T(1,128)}', space=vmem, size = 0x12000, scoped, tag = 'internal scratch']
  #allocation2 [shape = 'bf16[6,18,4]{2,1,0:T(8,128)(2,1)}', space=vmem, size = 0x9000, scoped, tag = 'scratch operand']
  %s0 = inlined_call_operand.vmem [shape: bf16[2,16,16,4], index: 0, kind: input, shape index: {}, may-alias: {0,1,2}]
  %s1 = inlined_call_operand.vmem [shape: bf16[2,16,16,4], index: 1, kind: input, shape index: {}, may-alias: {0,1,2}]
  %s2 = inlined_call_operand.vmem [shape: bf16[2,16,16,4], index: 2, kind: input, shape index: {}, may-alias: {0,1,2}]
  %s3 = inlined_call_operand.vmem [shape: f32[1,4], index: 3, kind: input, shape index: {}]
  %s4 = inlined_call_operand.vmem [shape: f32[1,4], index: 4, kind: input, shape index: {}]
  %s5 = inlined_call_operand.vmem [shape: bf16[36,8], index: 5, kind: input, shape index: {}]
  %s6 = inlined_call_operand.vmem [shape: bf16[2,16,16,8], index: 6, kind: output, shape index: {0}]
  %s7 = inlined_call_operand.vmem [shape: f32[2,4,8,8], index: 7, kind: output, shape index: {1}]
  %s8 = inlined_call_operand.vmem [shape: f32[2,4,8,8], index: 8, kind: output, shape index: {2}]
  %9 = xla_tuple %s6, %s7, %s8
  %s10 = sld [smem:[#allocation0]]
  $region73: #{resblock_pallas.4} parent=0
    _
  %s12 = ssub.s32 1, %s10
  %s13 = scalar_select 0, %s12, %s10
  loop: start=0, step=1, limit=10
  $region2: #{resblock_pallas.4} parent=0 // loop_pre_header
    _
  $region3: #{resblock_pallas.4} parent=0 // loop_header
    %s15 = sphi 0, %s19
    %p16 = scmp.ge.s32.totalorder %s15, 10
    %s22 = sphi 0, %s34
    %s23 = sphi 0, %s30
    %s24 = sphi 0, %s22
    %s25 = sphi 0, %s23
    %s26 = sphi 0, %s24
    %s27 = sphi 0, %s25
    %s39 = sphi 0, %s41
    %s42 = sphi 0, %s39
    %s43 = sphi 0, %s42
    %s59 = sphi 0, %s43
    %s75 = sphi 0, %s77
    %s78 = sphi 0, %s75
    %s79 = sphi 0, %s78
    %s95 = sphi 0, %s79
    %s111 = sphi 0, %s113
    %s114 = sphi 0, %s111
    %s115 = sphi 0, %s114
    %s131 = sphi 0, %s115
    %s135 = sphi 0, %s135
    %s137 = sphi 0, %s135
    %s138 = sphi 0, %s137
    %s152 = sphi 0, %s138
    %s156 = sphi 0, %s156
    %s158 = sphi 0, %s156
    %s159 = sphi 0, %s158
    %s173 = sphi 0, %s159
    %s177 = sphi 0, %s177
    %s179 = sphi 0, %s177
    %s180 = sphi 0, %s179
    %s194 = sphi 0, %s180
    %s202 = sphi 0, %s204
    %s205 = sphi 0, %s202
    %s206 = sphi 0, %s205
    %s222 = sphi 0, %s206
    %s230 = sphi 0, %s232
    %s233 = sphi 0, %s230
    %s234 = sphi 0, %s233
    %s250 = sphi 0, %s234
    %s258 = sphi 0, %s260
    %s261 = sphi 0, %s258
    %s262 = sphi 0, %s261
    %s278 = sphi 0, %s262
  $region4: #{resblock_pallas.4} parent=0 // loop_header_branch
    %18 = sbr.rel (%p16) target = $region8
  $region5: #{resblock_pallas.4} parent=0 // loop_body
    %s20 = ssub.s32 %s15, 1
    %s21 = ssub.s32 %s15, 2
    %s28 = sadd.s32 1, %s23
    %p29 = scmp.ge.s32.totalorder %s28, 4
    %s30 = scalar_select %p29, 0, %s28
    %s31 = sadd.s32 1, %s22
    %s32 = scalar_select %p29, %s31, %s22
    %p33 = scmp.ge.s32.totalorder %s32, 2
    %s34 = scalar_select %p33, 0, %s32
    %s35 = ssub.s32 %s22, %s34
    %s36 = ssub.s32 %s23, %s30
    %s37 = sor.u32 %s35, %s36
    %p38 = scmp.eq.s32.totalorder %s37, 0
    %s40 = sadd.s32 %s39, 1
    %s41 = scalar_select %p38, %s39, %s40
    %p44 = pneg %p38
    %p45 = scmp.eq.s32.totalorder %s15, 7
    %p46 = por %p44, %p45
    %p47 = scmp.ne.s32.totalorder %s39, %s42
    %p48 = scmp.eq.s32.totalorder %s15, 0
    %p49 = por %p47, %p48
    %p50 = scmp.ne.s32.totalorder %s39, %s42
    %p51 = scmp.eq.s32.totalorder %s20, 7
    %p52 = por %p50, %p51
    %p53 = scmp.ne.s32.totalorder %s42, %s43
    %p54 = scmp.eq.s32.totalorder %s20, 0
    %p55 = por %p53, %p54
    %p56 = scmp.ne.s32.totalorder %s42, %s43
    %p57 = scmp.eq.s32.totalorder %s21, 7
    %p58 = por %p56, %p57
    %p60 = scmp.ne.s32.totalorder %s43, %s59
    %p61 = scmp.eq.s32.totalorder %s21, 0
    %p62 = por %p60, %p61
    %s63 = smul.u32 %s23, 4
    %s64 = ssub.s32 %s63, 1
    %p65 = scmp.gt.s32.totalorder %s64, 0
    %s66 = scalar_select %p65, %s64, 0
    %s67 = smul.u32 %s30, 4
    %s68 = ssub.s32 %s67, 1
    %p69 = scmp.gt.s32.totalorder %s68, 0
    %s70 = scalar_select %p69, %s68, 0
    %s71 = ssub.s32 %s22, %s34
    %s72 = ssub.s32 %s66, %s70
    %s73 = sor.u32 %s71, %s72
    %p74 = scmp.eq.s32.totalorder %s73, 0
    %s76 = sadd.s32 %s75, 1
    %s77 = scalar_select %p74, %s75, %s76
    %p80 = pneg %p74
    %p81 = scmp.eq.s32.totalorder %s15, 7
    %p82 = por %p80, %p81
    %p83 = scmp.ne.s32.totalorder %s75, %s78
    %p84 = scmp.eq.s32.totalorder %s15, 0
    %p85 = por %p83, %p84
    %p86 = scmp.ne.s32.totalorder %s75, %s78
    %p87 = scmp.eq.s32.totalorder %s20, 7
    %p88 = por %p86, %p87
    %p89 = scmp.ne.s32.totalorder %s78, %s79
    %p90 = scmp.eq.s32.totalorder %s20, 0
    %p91 = por %p89, %p90
    %p92 = scmp.ne.s32.totalorder %s78, %s79
    %p93 = scmp.eq.s32.totalorder %s21, 7
    %p94 = por %p92, %p93
    %p96 = scmp.ne.s32.totalorder %s79, %s95
    %p97 = scmp.eq.s32.totalorder %s21, 0
    %p98 = por %p96, %p97
    %s99 = smul.u32 %s23, 4
    %s100 = sadd.s32 %s99, 4
    %p101 = scmp.lt.s32.totalorder %s100, 15
    %s102 = scalar_select %p101, %s100, 15
    %s103 = smul.u32 %s30, 4
    %s104 = sadd.s32 %s103, 4
    %p105 = scmp.lt.s32.totalorder %s104, 15
    %s106 = scalar_select %p105, %s104, 15
    %s107 = ssub.s32 %s22, %s34
    %s108 = ssub.s32 %s102, %s106
    %s109 = sor.u32 %s107, %s108
    %p110 = scmp.eq.s32.totalorder %s109, 0
    %s112 = sadd.s32 %s111, 1
    %s113 = scalar_select %p110, %s111, %s112
    %p116 = pneg %p110
    %p117 = scmp.eq.s32.totalorder %s15, 7
    %p118 = por %p116, %p117
    %p119 = scmp.ne.s32.totalorder %s111, %s114
    %p120 = scmp.eq.s32.totalorder %s15, 0
    %p121 = por %p119, %p120
    %p122 = scmp.ne.s32.totalorder %s111, %s114
    %p123 = scmp.eq.s32.totalorder %s20, 7
    %p124 = por %p122, %p123
    %p125 = scmp.ne.s32.totalorder %s114, %s115
    %p126 = scmp.eq.s32.totalorder %s20, 0
    %p127 = por %p125, %p126
    %p128 = scmp.ne.s32.totalorder %s114, %s115
    %p129 = scmp.eq.s32.totalorder %s21, 7
    %p130 = por %p128, %p129
    %p132 = scmp.ne.s32.totalorder %s115, %s131
    %p133 = scmp.eq.s32.totalorder %s21, 0
    %p134 = por %p132, %p133
    %s136 = sadd.s32 %s135, 1
    %p139 = scmp.eq.s32.totalorder %s15, 7
    %p140 = scmp.ne.s32.totalorder %s135, %s137
    %p141 = scmp.eq.s32.totalorder %s15, 0
    %p142 = por %p140, %p141
    %p143 = scmp.ne.s32.totalorder %s135, %s137
    %p144 = scmp.eq.s32.totalorder %s20, 7
    %p145 = por %p143, %p144
    %p146 = scmp.ne.s32.totalorder %s137, %s138
    %p147 = scmp.eq.s32.totalorder %s20, 0
    %p148 = por %p146, %p147
    %p149 = scmp.ne.s32.totalorder %s137, %s138
    %p150 = scmp.eq.s32.totalorder %s21, 7
    %p151 = por %p149, %p150
    %p153 = scmp.ne.s32.totalorder %s138, %s152
    %p154 = scmp.eq.s32.totalorder %s21, 0
    %p155 = por %p153, %p154
    %s157 = sadd.s32 %s156, 1
    %p160 = scmp.eq.s32.totalorder %s15, 7
    %p161 = scmp.ne.s32.totalorder %s156, %s158
    %p162 = scmp.eq.s32.totalorder %s15, 0
    %p163 = por %p161, %p162
    %p164 = scmp.ne.s32.totalorder %s156, %s158
    %p165 = scmp.eq.s32.totalorder %s20, 7
    %p166 = por %p164, %p165
    %p167 = scmp.ne.s32.totalorder %s158, %s159
    %p168 = scmp.eq.s32.totalorder %s20, 0
    %p169 = por %p167, %p168
    %p170 = scmp.ne.s32.totalorder %s158, %s159
    %p171 = scmp.eq.s32.totalorder %s21, 7
    %p172 = por %p170, %p171
    %p174 = scmp.ne.s32.totalorder %s159, %s173
    %p175 = scmp.eq.s32.totalorder %s21, 0
    %p176 = por %p174, %p175
    %s178 = sadd.s32 %s177, 1
    %p181 = scmp.eq.s32.totalorder %s15, 7
    %p182 = scmp.ne.s32.totalorder %s177, %s179
    %p183 = scmp.eq.s32.totalorder %s15, 0
    %p184 = por %p182, %p183
    %p185 = scmp.ne.s32.totalorder %s177, %s179
    %p186 = scmp.eq.s32.totalorder %s20, 7
    %p187 = por %p185, %p186
    %p188 = scmp.ne.s32.totalorder %s179, %s180
    %p189 = scmp.eq.s32.totalorder %s20, 0
    %p190 = por %p188, %p189
    %p191 = scmp.ne.s32.totalorder %s179, %s180
    %p192 = scmp.eq.s32.totalorder %s21, 7
    %p193 = por %p191, %p192
    %p195 = scmp.ne.s32.totalorder %s180, %s194
    %p196 = scmp.eq.s32.totalorder %s21, 0
    %p197 = por %p195, %p196
    %s198 = ssub.s32 %s22, %s34
    %s199 = ssub.s32 %s23, %s30
    %s200 = sor.u32 %s198, %s199
    %p201 = scmp.eq.s32.totalorder %s200, 0
    %s203 = sadd.s32 %s202, 1
    %s204 = scalar_select %p201, %s202, %s203
    %p207 = pneg %p201
    %p208 = scmp.eq.s32.totalorder %s15, 7
    %p209 = por %p207, %p208
    %p210 = scmp.ne.s32.totalorder %s202, %s205
    %p211 = scmp.eq.s32.totalorder %s15, 0
    %p212 = por %p210, %p211
    %p213 = scmp.ne.s32.totalorder %s202, %s205
    %p214 = scmp.eq.s32.totalorder %s20, 7
    %p215 = por %p213, %p214
    %p216 = scmp.ne.s32.totalorder %s205, %s206
    %p217 = scmp.eq.s32.totalorder %s20, 0
    %p218 = por %p216, %p217
    %p219 = scmp.ne.s32.totalorder %s205, %s206
    %p220 = scmp.eq.s32.totalorder %s21, 7
    %p221 = por %p219, %p220
    %p223 = scmp.ne.s32.totalorder %s206, %s222
    %p224 = scmp.eq.s32.totalorder %s21, 0
    %p225 = por %p223, %p224
    %s226 = ssub.s32 %s22, %s34
    %s227 = ssub.s32 %s23, %s30
    %s228 = sor.u32 %s226, %s227
    %p229 = scmp.eq.s32.totalorder %s228, 0
    %s231 = sadd.s32 %s230, 1
    %s232 = scalar_select %p229, %s230, %s231
    %p235 = pneg %p229
    %p236 = scmp.eq.s32.totalorder %s15, 7
    %p237 = por %p235, %p236
    %p238 = scmp.ne.s32.totalorder %s230, %s233
    %p239 = scmp.eq.s32.totalorder %s15, 0
    %p240 = por %p238, %p239
    %p241 = scmp.ne.s32.totalorder %s230, %s233
    %p242 = scmp.eq.s32.totalorder %s20, 7
    %p243 = por %p241, %p242
    %p244 = scmp.ne.s32.totalorder %s233, %s234
    %p245 = scmp.eq.s32.totalorder %s20, 0
    %p246 = por %p244, %p245
    %p247 = scmp.ne.s32.totalorder %s233, %s234
    %p248 = scmp.eq.s32.totalorder %s21, 7
    %p249 = por %p247, %p248
    %p251 = scmp.ne.s32.totalorder %s234, %s250
    %p252 = scmp.eq.s32.totalorder %s21, 0
    %p253 = por %p251, %p252
    %s254 = ssub.s32 %s22, %s34
    %s255 = ssub.s32 %s23, %s30
    %s256 = sor.u32 %s254, %s255
    %p257 = scmp.eq.s32.totalorder %s256, 0
    %s259 = sadd.s32 %s258, 1
    %s260 = scalar_select %p257, %s258, %s259
    %p263 = pneg %p257
    %p264 = scmp.eq.s32.totalorder %s15, 7
    %p265 = por %p263, %p264
    %p266 = scmp.ne.s32.totalorder %s258, %s261
    %p267 = scmp.eq.s32.totalorder %s15, 0
    %p268 = por %p266, %p267
    %p269 = scmp.ne.s32.totalorder %s258, %s261
    %p270 = scmp.eq.s32.totalorder %s20, 7
    %p271 = por %p269, %p270
    %p272 = scmp.ne.s32.totalorder %s261, %s262
    %p273 = scmp.eq.s32.totalorder %s20, 0
    %p274 = por %p272, %p273
    %p275 = scmp.ne.s32.totalorder %s261, %s262
    %p276 = scmp.eq.s32.totalorder %s21, 7
    %p277 = por %p275, %p276
    %p279 = scmp.ne.s32.totalorder %s262, %s278
    %p280 = scmp.eq.s32.totalorder %s21, 0
    %p281 = por %p279, %p280
    %p282 = scmp.le.s32.totalorder 1, %s15
    %p283 = scmp.lt.s32.totalorder %s15, 9
    %p284 = pnand %p282, %p283
    %p285 = pneg %p284
    // Predicated region
    $region9: #{resblock_pallas.4} parent=5 // pred_check
      _
    $region10: #{resblock_pallas.4} parent=5 // pred_check_branch
      %287 = sbr.rel (%p284) target = $region12
    $region11: #{resblock_pallas.4} parent=5 // pred_region
      %s288 = ssub.s32 %s15, 1
      // Predicated region
      $region13: #{resblock_pallas.4} parent=11 // pred_check
        %p289 = pneg %p148
      $region14: #{resblock_pallas.4} parent=11 // pred_check_branch
        %291 = sbr.rel (%p289) target = $region16
      $region15: #{resblock_pallas.4} parent=11 // pred_region
        _
      $region16: #{resblock_pallas.4} parent=11 // pred_fallthru
        _
      // Predicated region
      $region17: #{resblock_pallas.4} parent=11 // pred_check
        %p292 = pneg %p169
      $region18: #{resblock_pallas.4} parent=11 // pred_check_branch
        %294 = sbr.rel (%p292) target = $region20
      $region19: #{resblock_pallas.4} parent=11 // pred_region
        _
      $region20: #{resblock_pallas.4} parent=11 // pred_fallthru
        _
      // Predicated region
      $region21: #{resblock_pallas.4} parent=11 // pred_check
        %p295 = pneg %p190
      $region22: #{resblock_pallas.4} parent=11 // pred_check_branch
        %297 = sbr.rel (%p295) target = $region24
      $region23: #{resblock_pallas.4} parent=11 // pred_region
        _
      $region24: #{resblock_pallas.4} parent=11 // pred_fallthru
        _
    $region12: #{resblock_pallas.4} parent=5 // pred_fallthru
      _
    %p298 = scmp.lt.s32.totalorder %s15, 8
    // Predicated region
    $region25: #{resblock_pallas.4} parent=5 // pred_check
      %p299 = pneg %p298
    $region26: #{resblock_pallas.4} parent=5 // pred_check_branch
      %301 = sbr.rel (%p299) target = $region28
    $region27: #{resblock_pallas.4} parent=5 // pred_region
      // Predicated region
      $region29: #{resblock_pallas.4} parent=27 // pred_check
        %p302 = pneg %p49
      $region30: #{resblock_pallas.4} parent=27 // pred_check_branch
        %304 = sbr.rel (%p302) target = $region32
      $region31: #{resblock_pallas.4} parent=27 // pred_region
        %s305 = smul.u32 4, %s23
        %p306 = scmp.lt.s32.totalorder %s22, 1
        %s307 = scalar_select %p306, %s22, 1
        %p308 = scmp.lt.s32.totalorder %s305, 15
        %s309 = scalar_select %p308, %s305, 15
        %s310 = smul.addr %s309, 2
        %s311 = smul.addr %s307, 32
        %s312 = sadd.s32 %s310, %s311
        %s313 = smul.addr %s312, 4
        %s314 = scalar_lea.vmem %s0, %s313
        %s315 = smul.u32 4, %s23
      $region32: #{resblock_pallas.4} parent=27 // pred_fallthru
        _
      // Predicated region
      $region33: #{resblock_pallas.4} parent=27 // pred_check
        %p316 = pneg %p85
      $region34: #{resblock_pallas.4} parent=27 // pred_check_branch
        %318 = sbr.rel (%p316) target = $region36
      $region35: #{resblock_pallas.4} parent=27 // pred_region
        %s319 = smul.u32 %s23, 4
        %s320 = ssub.s32 %s319, 1
        %p321 = scmp.gt.s32.totalorder %s320, 0
        %s322 = scalar_select %p321, %s320, 0
        %p323 = scmp.lt.s32.totalorder %s22, 1
        %s324 = scalar_select %p323, %s22, 1
        %p325 = scmp.lt.s32.totalorder %s322, 15
        %s326 = scalar_select %p325, %s322, 15
        %s327 = smul.addr %s326, 2
        %s328 = smul.addr %s324, 32
        %s329 = sadd.s32 %s327, %s328
        %s330 = smul.addr %s329, 4
        %s331 = scalar_lea.vmem %s1, %s330
        %s332 = smul.u32 %s23, 4
        %s333 = ssub.s32 %s332, 1
        %p334 = scmp.gt.s32.totalorder %s333, 0
        %s335 = scalar_select %p334, %s333, 0
      $region36: #{resblock_pallas.4} parent=27 // pred_fallthru
        _
      // Predicated region
      $region37: #{resblock_pallas.4} parent=27 // pred_check
        %p336 = pneg %p121
      $region38: #{resblock_pallas.4} parent=27 // pred_check_branch
        %338 = sbr.rel (%p336) target = $region40
      $region39: #{resblock_pallas.4} parent=27 // pred_region
        %s339 = smul.u32 %s23, 4
        %s340 = sadd.s32 %s339, 4
        %p341 = scmp.lt.s32.totalorder %s340, 15
        %s342 = scalar_select %p341, %s340, 15
        %p343 = scmp.lt.s32.totalorder %s22, 1
        %s344 = scalar_select %p343, %s22, 1
        %p345 = scmp.lt.s32.totalorder %s342, 15
        %s346 = scalar_select %p345, %s342, 15
        %s347 = smul.addr %s346, 2
        %s348 = smul.addr %s344, 32
        %s349 = sadd.s32 %s347, %s348
        %s350 = smul.addr %s349, 4
        %s351 = scalar_lea.vmem %s2, %s350
        %s352 = smul.u32 %s23, 4
        %s353 = sadd.s32 %s352, 4
        %p354 = scmp.lt.s32.totalorder %s353, 15
        %s355 = scalar_select %p354, %s353, 15
      $region40: #{resblock_pallas.4} parent=27 // pred_fallthru
        _
    $region28: #{resblock_pallas.4} parent=5 // pred_fallthru
      _
    %p356 = scmp.le.s32.totalorder 1, %s15
    %p357 = scmp.lt.s32.totalorder %s15, 9
    %p358 = pnand %p356, %p357
    %p359 = pneg %p358
    // Predicated region
    $region41: #{resblock_pallas.4} parent=5 // pred_check
      _
    $region42: #{resblock_pallas.4} parent=5 // pred_check_branch
      %361 = sbr.rel (%p358) target = $region44
    $region43: #{resblock_pallas.4} parent=5 // pred_region
      %s362 = ssub.s32 %s15, 1
      %s363 = smul.u32 4, %s25
      %p364 = scmp.lt.s32.totalorder %s24, 1
      %s365 = scalar_select %p364, %s24, 1
      %p366 = scmp.lt.s32.totalorder %s363, 15
      %s367 = scalar_select %p366, %s363, 15
      %s368 = smul.addr %s367, 2
      %s369 = smul.addr %s365, 32
      %s370 = sadd.s32 %s368, %s369
      %s371 = smul.addr %s370, 4
      %s372 = scalar_lea.vmem %s0, %s371
      %p373 = pneg %p55
      %p374 = pneg %p52
      %s375 = smul.u32 %s25, 4
      %s376 = ssub.s32 %s375, 1
      %p377 = scmp.gt.s32.totalorder %s376, 0
      %s378 = scalar_select %p377, %s376, 0
      %p379 = scmp.lt.s32.totalorder %s24, 1
      %s380 = scalar_select %p379, %s24, 1
      %p381 = scmp.lt.s32.totalorder %s378, 15
      %s382 = scalar_select %p381, %s378, 15
      %s383 = smul.addr %s382, 2
      %s384 = smul.addr %s380, 32
      %s385 = sadd.s32 %s383, %s384
      %s386 = smul.addr %s385, 4
      %s387 = scalar_lea.vmem %s1, %s386
      %p388 = pneg %p91
      %p389 = pneg %p88
      %s390 = smul.u32 %s25, 4
      %s391 = sadd.s32 %s390, 4
      %p392 = scmp.lt.s32.totalorder %s391, 15
      %s393 = scalar_select %p392, %s391, 15
      %p394 = scmp.lt.s32.totalorder %s24, 1
      %s395 = scalar_select %p394, %s24, 1
      %p396 = scmp.lt.s32.totalorder %s393, 15
      %s397 = scalar_select %p396, %s393, 15
      %s398 = smul.addr %s397, 2
      %s399 = smul.addr %s395, 32
      %s400 = sadd.s32 %s398, %s399
      %s401 = smul.addr %s400, 4
      %s402 = scalar_lea.vmem %s2, %s401
      %p403 = pneg %p127
      %p404 = pneg %p124
      %p405 = pneg %p148
      %p406 = pneg %p145
      %p407 = pneg %p169
      %p408 = pneg %p166
      %p409 = pneg %p190
      %p410 = pneg %p187
      %p411 = pneg %p218
      %p412 = pneg %p215
      %s413 = smul.u32 4, %s25
      %p414 = scmp.lt.s32.totalorder %s24, 1
      %s415 = scalar_select %p414, %s24, 1
      %p416 = scmp.lt.s32.totalorder %s413, 15
      %s417 = scalar_select %p416, %s413, 15
      %s418 = smul.addr %s417, 2
      %s419 = smul.addr %s415, 32
      %s420 = sadd.s32 %s418, %s419
      %s421 = smul.addr %s420, 4
      %s422 = scalar_lea.vmem %s6, %s421
      %p423 = pneg %p246
      %p424 = pneg %p243
      %p425 = scmp.lt.s32.totalorder %s24, 1
      %s426 = scalar_select %p425, %s24, 1
      %p427 = scmp.lt.s32.totalorder %s25, 3
      %s428 = scalar_select %p427, %s25, 3
      %s429 = smul.addr %s426, 4
      %s430 = sadd.s32 %s428, %s429
      %s431 = smul.addr %s430, 8
      %s432 = scalar_lea.vmem %s7, %s431
      %p433 = pneg %p274
      %p434 = pneg %p271
      %p435 = scmp.lt.s32.totalorder %s24, 1
      %s436 = scalar_select %p435, %s24, 1
      %p437 = scmp.lt.s32.totalorder %s25, 3
      %s438 = scalar_select %p437, %s25, 3
      %s439 = smul.addr %s436, 4
      %s440 = sadd.s32 %s438, %s439
      %s441 = smul.addr %s440, 8
      %s442 = scalar_lea.vmem %s8, %s441
      %s443 = smul.u32 4, %s25
      %p444 = scmp.lt.s32.totalorder %s24, 1
      %s445 = scalar_select %p444, %s24, 1
      %p446 = scmp.lt.s32.totalorder %s443, 15
      %s447 = scalar_select %p446, %s443, 15
      %s448 = smul.addr %s447, 2
      %s449 = smul.addr %s445, 32
      %s450 = sadd.s32 %s448, %s449
      %s451 = smul.addr %s450, 4
      %s452 = scalar_lea.vmem %s0, %s451
      %s453 = smul.u32 4, %s25
      %s454 = smul.u32 %s25, 4
      %s455 = ssub.s32 %s454, 1
      %p456 = scmp.gt.s32.totalorder %s455, 0
      %s457 = scalar_select %p456, %s455, 0
      %p458 = scmp.lt.s32.totalorder %s24, 1
      %s459 = scalar_select %p458, %s24, 1
      %p460 = scmp.lt.s32.totalorder %s457, 15
      %s461 = scalar_select %p460, %s457, 15
      %s462 = smul.addr %s461, 2
      %s463 = smul.addr %s459, 32
      %s464 = sadd.s32 %s462, %s463
      %s465 = smul.addr %s464, 4
      %s466 = scalar_lea.vmem %s1, %s465
      %s467 = smul.u32 %s25, 4
      %s468 = ssub.s32 %s467, 1
      %p469 = scmp.gt.s32.totalorder %s468, 0
      %s470 = scalar_select %p469, %s468, 0
      %s471 = smul.u32 %s25, 4
      %s472 = sadd.s32 %s471, 4
      %p473 = scmp.lt.s32.totalorder %s472, 15
      %s474 = scalar_select %p473, %s472, 15
      %p475 = scmp.lt.s32.totalorder %s24, 1
      %s476 = scalar_select %p475, %s24, 1
      %p477 = scmp.lt.s32.totalorder %s474, 15
      %s478 = scalar_select %p477, %s474, 15
      %s479 = smul.addr %s478, 2
      %s480 = smul.addr %s476, 32
      %s481 = sadd.s32 %s479, %s480
      %s482 = smul.addr %s481, 4
      %s483 = scalar_lea.vmem %s2, %s482
      %s484 = smul.u32 %s25, 4
      %s485 = sadd.s32 %s484, 4
      %p486 = scmp.lt.s32.totalorder %s485, 15
      %s487 = scalar_select %p486, %s485, 15
      %s488 = smul.u32 4, %s25
      %p489 = scmp.lt.s32.totalorder %s24, 1
      %s490 = scalar_select %p489, %s24, 1
      %p491 = scmp.lt.s32.totalorder %s488, 15
      %s492 = scalar_select %p491, %s488, 15
      %s493 = smul.addr %s492, 2
      %s494 = smul.addr %s490, 32
      %s495 = sadd.s32 %s493, %s494
      %s496 = smul.addr %s495, 4
      %s497 = scalar_lea.vmem %s6, %s496
      %s498 = smul.u32 4, %s25
      %p499 = scmp.lt.s32.totalorder %s24, 1
      %s500 = scalar_select %p499, %s24, 1
      %p501 = scmp.lt.s32.totalorder %s25, 3
      %s502 = scalar_select %p501, %s25, 3
      %s503 = smul.addr %s500, 4
      %s504 = sadd.s32 %s502, %s503
      %s505 = smul.addr %s504, 8
      %s506 = scalar_lea.vmem %s7, %s505
      %p507 = scmp.lt.s32.totalorder %s24, 1
      %s508 = scalar_select %p507, %s24, 1
      %p509 = scmp.lt.s32.totalorder %s25, 3
      %s510 = scalar_select %p509, %s25, 3
      %s511 = smul.addr %s508, 4
      %s512 = sadd.s32 %s510, %s511
      %s513 = smul.addr %s512, 8
      %s514 = scalar_lea.vmem %s8, %s513
      %v516 = vld [vmem:[%s3] sm:$0x1]
      %v517 = vld [vmem:[%s4] sm:$0x1]
      %v518 = vld [vmem:[%s452] sm:$0xf]
      %v519 = vld [vmem:[%s452 + $0x4] sm:$0xf]
      %v520 = vld [vmem:[%s452 + $0x8] sm:$0xf]
      %v521 = vld [vmem:[%s452 + $0xc] sm:$0xf]
      %v522 = vld [vmem:[%s452 + $0x10] sm:$0xf]
      %v523 = vld [vmem:[%s452 + $0x14] sm:$0xf]
      %v524 = vld [vmem:[%s452 + $0x18] sm:$0xf]
      %v525 = vld [vmem:[%s452 + $0x1c] sm:$0xf]
      %v526 = vunpack.c.l.bf16 %v518
      %v527 = vunpack.c.l.bf16 %v519
      %v528 = vunpack.c.l.bf16 %v520
      %v529 = vunpack.c.l.bf16 %v521
      %v530 = vunpack.c.l.bf16 %v522
      %v531 = vunpack.c.l.bf16 %v523
      %v532 = vunpack.c.l.bf16 %v524
      %v533 = vunpack.c.l.bf16 %v525
      %v535 = vlaneseq
      %v536 = vshrl.u32 %v535, 7
      %v537 = vsub.s32 0, %v536
      %v538 = vrot.slane %v516, %v537
      %v540 = vmul.f32 %v526, %v538
      %v541 = vmul.f32 %v527, %v538
      %v542 = vmul.f32 %v528, %v538
      %v543 = vmul.f32 %v529, %v538
      %v544 = vmul.f32 %v530, %v538
      %v545 = vmul.f32 %v531, %v538
      %v546 = vmul.f32 %v532, %v538
      %v547 = vmul.f32 %v533, %v538
      %v549 = vlaneseq
      %v550 = vshrl.u32 %v549, 7
      %v551 = vsub.s32 0, %v550
      %v552 = vrot.slane %v517, %v551
      %v554 = vadd.f32 %v540, %v552
      %v555 = vadd.f32 %v541, %v552
      %v556 = vadd.f32 %v542, %v552
      %v557 = vadd.f32 %v543, %v552
      %v558 = vadd.f32 %v544, %v552
      %v559 = vadd.f32 %v545, %v552
      %v560 = vadd.f32 %v546, %v552
      %v561 = vadd.f32 %v547, %v552
      %vm562 = vcmp.gt.f32.partialorder %v554, 0.0
      %vm563 = vcmp.gt.f32.partialorder %v555, 0.0
      %vm564 = vcmp.gt.f32.partialorder %v556, 0.0
      %vm565 = vcmp.gt.f32.partialorder %v557, 0.0
      %vm566 = vcmp.gt.f32.partialorder %v558, 0.0
      %vm567 = vcmp.gt.f32.partialorder %v559, 0.0
      %vm568 = vcmp.gt.f32.partialorder %v560, 0.0
      %vm569 = vcmp.gt.f32.partialorder %v561, 0.0
      %v570 = vmul.f32 %v554, 0.1
      %v571 = vmul.f32 %v555, 0.1
      %v572 = vmul.f32 %v556, 0.1
      %v573 = vmul.f32 %v557, 0.1
      %v574 = vmul.f32 %v558, 0.1
      %v575 = vmul.f32 %v559, 0.1
      %v576 = vmul.f32 %v560, 0.1
      %v577 = vmul.f32 %v561, 0.1
      %v578 = vsel %vm562, %v554, %v570
      %v579 = vsel %vm563, %v555, %v571
      %v580 = vsel %vm564, %v556, %v572
      %v581 = vsel %vm565, %v557, %v573
      %v582 = vsel %vm566, %v558, %v574
      %v583 = vsel %vm567, %v559, %v575
      %v584 = vsel %vm568, %v560, %v576
      %v585 = vsel %vm569, %v561, %v577
      %v586 = vld [vmem:[%s466] sm:$0xf]
      %v587 = vld [vmem:[%s466 + $0x4] sm:$0xf]
      %v588 = vunpack.c.l.bf16 %v586
      %v589 = vunpack.c.l.bf16 %v587
      %v590 = vmul.f32 %v588, %v538
      %v591 = vmul.f32 %v589, %v538
      %v592 = vadd.f32 %v590, %v552
      %v593 = vadd.f32 %v591, %v552
      %vm594 = vcmp.gt.f32.partialorder %v592, 0.0
      %vm595 = vcmp.gt.f32.partialorder %v593, 0.0
      %v596 = vmul.f32 %v592, 0.1
      %v597 = vmul.f32 %v593, 0.1
      %v598 = vsel %vm594, %v592, %v596
      %v599 = vsel %vm595, %v593, %v597
      %p600 = scmp.gt.s32.totalorder %s25, 0
      %s601 = scalar_select %p600, 1, 0
      %s602 = scvt.s32.f32 %s601
      %v603 = vstv %s602
      %v604 = vmul.f32 %v598, %v603
      %v605 = vmul.f32 %v599, %v603
      %v606 = vld [vmem:[%s483] sm:$0xf]
      %v607 = vld [vmem:[%s483 + $0x4] sm:$0xf]
      %v608 = vunpack.c.l.bf16 %v606
      %v609 = vunpack.c.l.bf16 %v607
      %v610 = vmul.f32 %v608, %v538
      %v611 = vmul.f32 %v609, %v538
      %v612 = vadd.f32 %v610, %v552
      %v613 = vadd.f32 %v611, %v552
      %vm614 = vcmp.gt.f32.partialorder %v612, 0.0
      %vm615 = vcmp.gt.f32.partialorder %v613, 0.0
      %v616 = vmul.f32 %v612, 0.1
      %v617 = vmul.f32 %v613, 0.1
      %v618 = vsel %vm614, %v612, %v616
      %v619 = vsel %vm615, %v613, %v617
      %p620 = scmp.lt.s32.totalorder %s25, 3
      %s621 = scalar_select %p620, 1, 0
      %s622 = scvt.s32.f32 %s621
      %v623 = vstv %s622
      %v624 = vmul.f32 %v618, %v623
      %v625 = vmul.f32 %v619, %v623
      %vm626 = vcmask 24576
      %vm627 = vsmask.f32 256
      %vm628 = vmand %vm626, %vm627
      %v629 = vld [vmem:[#allocation2] sm:$0x1]
      %v630 = vsel %vm628, 0, %v629
      %631 = vst [vmem:[#allocation2] sm:$0x1] %v630
      %v632 = vld [vmem:[#allocation2 + $0xc] sm:$0x1]
      %v633 = vsel %vm628, 0, %v632
      %634 = vst [vmem:[#allocation2 + $0xc] sm:$0x1] %v633
      %v635 = vld [vmem:[#allocation2 + $0x18] sm:$0x1]
      %v636 = vsel %vm628, 0, %v635
      %637 = vst [vmem:[#allocation2 + $0x18] sm:$0x1] %v636
      %v638 = vld [vmem:[#allocation2 + $0x24] sm:$0x1]
      %v639 = vsel %vm628, 0, %v638
      %640 = vst [vmem:[#allocation2 + $0x24] sm:$0x1] %v639
      %v641 = vld [vmem:[#allocation2 + $0x30] sm:$0x1]
      %v642 = vsel %vm628, 0, %v641
      %643 = vst [vmem:[#allocation2 + $0x30] sm:$0x1] %v642
      %v644 = vld [vmem:[#allocation2 + $0x3c] sm:$0x1]
      %v645 = vsel %vm628, 0, %v644
      %646 = vst [vmem:[#allocation2 + $0x3c] sm:$0x1] %v645
      %vm647 = vsmask.f32 7938
      %vm648 = vmand %vm626, %vm647
      %v649 = vld [vmem:[#allocation2 + $0x8] sm:$0x1]
      %v650 = vsel %vm648, 0, %v649
      %651 = vst [vmem:[#allocation2 + $0x8] sm:$0x1] %v650
      %v652 = vld [vmem:[#allocation2 + $0x14] sm:$0x1]
      %v653 = vsel %vm648, 0, %v652
      %654 = vst [vmem:[#allocation2 + $0x14] sm:$0x1] %v653
      %v655 = vld [vmem:[#allocation2 + $0x20] sm:$0x1]
      %v656 = vsel %vm648, 0, %v655
      %657 = vst [vmem:[#allocation2 + $0x20] sm:$0x1] %v656
      %v658 = vld [vmem:[#allocation2 + $0x2c] sm:$0x1]
      %v659 = vsel %vm648, 0, %v658
      %660 = vst [vmem:[#allocation2 + $0x2c] sm:$0x1] %v659
      %v661 = vld [vmem:[#allocation2 + $0x38] sm:$0x1]
      %v662 = vsel %vm648, 0, %v661
      %663 = vst [vmem:[#allocation2 + $0x38] sm:$0x1] %v662
      %v664 = vld [vmem:[#allocation2 + $0x44] sm:$0x1]
      %v665 = vsel %vm648, 0, %v664
      %666 = vst [vmem:[#allocation2 + $0x44] sm:$0x1] %v665
      %v667 = vpack.c.bf16 %v605, %v604
      %v669 = vunpack.c.l.b16 %v667
      %v670 = vunpack.c.h.b16 %v667
      %v671 = vpack.c.b16 %v669, %v669
      %v672 = vpack.c.b16 %v670, %v670
      %vm673 = vsmask.f32 4368
      %vm674 = vmor %vm627, %vm673
      %v676 = vshrl.u32 %v671, 16
      %v678 = vrot.slane %v676, 7
      %v679 = vshll.u32 %v671, 16
      %v681 = vor.u32 %v678, %v679
      %v682 = vrot.slane %v678, 4
      %v684 = vshrl.u32 %v672, 16
      %v686 = vrot.slane %v684, 7
      %v687 = vshll.u32 %v672, 16
      %v689 = vor.u32 %v686, %v687
      %v690 = vsel %vm674, %v682, %v689
      %v691 = vrot.slane %v686, 4
      %vm695 = vcmask 27648
      %vm696 = vmand %vm695, %vm647
      %v697 = vld [vmem:[#allocation2] sm:$0xf]
      %v698 = vsel %vm696, %v681, %v697
      %699 = vst [vmem:[#allocation2] sm:$0xf] %v698
      %vm700 = vcmask 27648
      %701 = vst.msk [vmem:[#allocation2 + $0x4] sm:$0xf] %vm700, %v690
      %v702 = vld [vmem:[#allocation2 + $0x8] sm:$0x1]
      %v703 = vsel %vm628, %v691, %v702
      %704 = vst [vmem:[#allocation2 + $0x8] sm:$0x1] %v703
      %v705 = vpack.c.bf16 %v625, %v624
      %v707 = vunpack.c.l.b16 %v705
      %v708 = vunpack.c.h.b16 %v705
      %v709 = vpack.c.b16 %v707, %v707
      %v710 = vpack.c.b16 %v708, %v708
      %v712 = vshrl.u32 %v709, 16
      %v714 = vrot.slane %v712, 7
      %v715 = vshll.u32 %v709, 16
      %v717 = vor.u32 %v714, %v715
      %v718 = vrot.slane %v714, 4
      %v720 = vshrl.u32 %v710, 16
      %v722 = vrot.slane %v720, 7
      %v723 = vshll.u32 %v710, 16
      %v725 = vor.u32 %v722, %v723
      %v726 = vsel %vm674, %v718, %v725
      %v727 = vrot.slane %v722, 4
      %s731 = scalar_lea.vmem [#allocation2], 60
      %v732 = vld [vmem:[%s731] sm:$0xf]
      %v733 = vsel %vm696, %v717, %v732
      %734 = vst [vmem:[%s731] sm:$0xf] %v733
      %735 = vst.msk [vmem:[%s731 + $0x4] sm:$0xf] %vm700, %v726
      %v736 = vld [vmem:[%s731 + $0x8] sm:$0x1]
      %v737 = vsel %vm628, %v727, %v736
      %738 = vst [vmem:[%s731 + $0x8] sm:$0x1] %v737
      %v739 = vpack.c.bf16 %v579, %v578
      %v740 = vpack.c.bf16 %v581, %v580
      %v741 = vpack.c.bf16 %v583, %v582
      %v742 = vpack.c.bf16 %v585, %v584
      %v747 = vunpack.c.l.b16 %v739
      %v748 = vunpack.c.h.b16 %v739
      %v749 = vunpack.c.l.b16 %v740
      %v750 = vunpack.c.h.b16 %v740
      %v751 = vunpack.c.l.b16 %v741
      %v752 = vunpack.c.h.b16 %v741
      %v753 = vunpack.c.l.b16 %v742
      %v754 = vunpack.c.h.b16 %v742
      %v755 = vpack.c.b16 %v747, %v747
      %v756 = vpack.c.b16 %v748, %v748
      %v757 = vpack.c.b16 %v749, %v749
      %v758 = vpack.c.b16 %v750, %v750
      %v759 = vpack.c.b16 %v751, %v751
      %v760 = vpack.c.b16 %v752, %v752
      %v761 = vpack.c.b16 %v753, %v753
      %v762 = vpack.c.b16 %v754, %v754
      %v764 = vshrl.u32 %v755, 16
      %v766 = vrot.slane %v764, 7
      %v767 = vshll.u32 %v755, 16
      %v769 = vor.u32 %v766, %v767
      %v770 = vrot.slane %v766, 4
      %v772 = vshrl.u32 %v756, 16
      %v774 = vrot.slane %v772, 7
      %v775 = vshll.u32 %v756, 16
      %v777 = vor.u32 %v774, %v775
      %v778 = vsel %vm674, %v770, %v777
      %v779 = vrot.slane %v774, 4
      %v781 = vshrl.u32 %v757, 16
      %v783 = vrot.slane %v781, 7
      %v784 = vshll.u32 %v757, 16
      %v786 = vor.u32 %v783, %v784
      %v787 = vrot.slane %v783, 4
      %v789 = vshrl.u32 %v758, 16
      %v791 = vrot.slane %v789, 7
      %v792 = vshll.u32 %v758, 16
      %v794 = vor.u32 %v791, %v792
      %v795 = vsel %vm674, %v787, %v794
      %v796 = vrot.slane %v791, 4
      %v798 = vshrl.u32 %v759, 16
      %v800 = vrot.slane %v798, 7
      %v801 = vshll.u32 %v759, 16
      %v803 = vor.u32 %v800, %v801
      %v804 = vrot.slane %v800, 4
      %v806 = vshrl.u32 %v760, 16
      %v808 = vrot.slane %v806, 7
      %v809 = vshll.u32 %v760, 16
      %v811 = vor.u32 %v808, %v809
      %v812 = vsel %vm674, %v804, %v811
      %v813 = vrot.slane %v808, 4
      %v815 = vshrl.u32 %v761, 16
      %v817 = vrot.slane %v815, 7
      %v818 = vshll.u32 %v761, 16
      %v820 = vor.u32 %v817, %v818
      %v821 = vrot.slane %v817, 4
      %v823 = vshrl.u32 %v762, 16
      %v825 = vrot.slane %v823, 7
      %v826 = vshll.u32 %v762, 16
      %v828 = vor.u32 %v825, %v826
      %v829 = vsel %vm674, %v821, %v828
      %v830 = vrot.slane %v825, 4
      %s843 = scalar_lea.vmem [#allocation2], 12
      %v844 = vld [vmem:[%s843] sm:$0xf]
      %v845 = vsel %vm696, %v769, %v844
      %846 = vst [vmem:[%s843] sm:$0xf] %v845
      %847 = vst.msk [vmem:[%s843 + $0x4] sm:$0xf] %vm700, %v778
      %v848 = vld [vmem:[%s843 + $0x8] sm:$0x1]
      %v849 = vsel %vm628, %v779, %v848
      %850 = vst [vmem:[%s843 + $0x8] sm:$0x1] %v849
      %v851 = vld [vmem:[%s843 + $0xc] sm:$0xf]
      %v852 = vsel %vm696, %v786, %v851
      %853 = vst [vmem:[%s843 + $0xc] sm:$0xf] %v852
      %854 = vst.msk [vmem:[%s843 + $0x10] sm:$0xf] %vm700, %v795
      %v855 = vld [vmem:[%s843 + $0x14] sm:$0x1]
      %v856 = vsel %vm628, %v796, %v855
      %857 = vst [vmem:[%s843 + $0x14] sm:$0x1] %v856
      %v858 = vld [vmem:[%s843 + $0x18] sm:$0xf]
      %v859 = vsel %vm696, %v803, %v858
      %860 = vst [vmem:[%s843 + $0x18] sm:$0xf] %v859
      %861 = vst.msk [vmem:[%s843 + $0x1c] sm:$0xf] %vm700, %v812
      %v862 = vld [vmem:[%s843 + $0x20] sm:$0x1]
      %v863 = vsel %vm628, %v813, %v862
      %864 = vst [vmem:[%s843 + $0x20] sm:$0x1] %v863
      %v865 = vld [vmem:[%s843 + $0x24] sm:$0xf]
      %v866 = vsel %vm696, %v820, %v865
      %867 = vst [vmem:[%s843 + $0x24] sm:$0xf] %v866
      %868 = vst.msk [vmem:[%s843 + $0x28] sm:$0xf] %vm700, %v829
      %v869 = vld [vmem:[%s843 + $0x2c] sm:$0x1]
      %v870 = vsel %vm628, %v830, %v869
      %871 = vst [vmem:[%s843 + $0x2c] sm:$0x1] %v870
      %v872 = vld [vmem:[#allocation2] sm:$0xf]
      %v873 = vld [vmem:[#allocation2 + $0x4] sm:$0xf]
      %v874 = vld [vmem:[#allocation2 + $0xc] sm:$0xf]
      %v875 = vld [vmem:[#allocation2 + $0x10] sm:$0xf]
      %v876 = vld [vmem:[#allocation2 + $0x18] sm:$0xf]
      %v877 = vld [vmem:[#allocation2 + $0x1c] sm:$0xf]
      %v878 = vld [vmem:[#allocation2 + $0x24] sm:$0xf]
      %v879 = vld [vmem:[#allocation2 + $0x28] sm:$0xf]
      %v880 = vld [vmem:[#allocation2 + $0x8] sm:$0x1]
      %v881 = vld [vmem:[#allocation2 + $0x14] sm:$0x1]
      %v882 = vld [vmem:[#allocation2 + $0x20] sm:$0x1]
      %v883 = vld [vmem:[#allocation2 + $0x2c] sm:$0x1]
      %v884 = vld [vmem:[#allocation2] sm:$0xe]
      %v885 = vld [vmem:[#allocation2 + $0xc] sm:$0xe]
      %v886 = vld [vmem:[#allocation2 + $0x18] sm:$0xe]
      %v887 = vld [vmem:[#allocation2 + $0x24] sm:$0xe]
      %v888 = vld [vmem:[%s843] sm:$0xf]
      %v889 = vld [vmem:[%s843 + $0x4] sm:$0xf]
      %v890 = vld [vmem:[%s843 + $0xc] sm:$0xf]
      %v891 = vld [vmem:[%s843 + $0x10] sm:$0xf]
      %v892 = vld [vmem:[%s843 + $0x18] sm:$0xf]
      %v893 = vld [vmem:[%s843 + $0x1c] sm:$0xf]
      %v894 = vld [vmem:[%s843 + $0x24] sm:$0xf]
      %v895 = vld [vmem:[%s843 + $0x28] sm:$0xf]
      %v896 = vld [vmem:[%s843 + $0x8] sm:$0x1]
      %v897 = vld [vmem:[%s843 + $0x14] sm:$0x1]
      %v898 = vld [vmem:[%s843 + $0x20] sm:$0x1]
      %v899 = vld [vmem:[%s843 + $0x2c] sm:$0x1]
      %v900 = vld [vmem:[%s843] sm:$0xe]
      %v901 = vld [vmem:[%s843 + $0xc] sm:$0xe]
      %v902 = vld [vmem:[%s843 + $0x18] sm:$0xe]
      %v903 = vld [vmem:[%s843 + $0x24] sm:$0xe]
      %s904 = scalar_lea.vmem [#allocation2], 24
      %v905 = vld [vmem:[%s904] sm:$0xf]
      %v906 = vld [vmem:[%s904 + $0x4] sm:$0xf]
      %v907 = vld [vmem:[%s904 + $0xc] sm:$0xf]
      %v908 = vld [vmem:[%s904 + $0x10] sm:$0xf]
      %v909 = vld [vmem:[%s904 + $0x18] sm:$0xf]
      %v910 = vld [vmem:[%s904 + $0x1c] sm:$0xf]
      %v911 = vld [vmem:[%s904 + $0x24] sm:$0xf]
      %v912 = vld [vmem:[%s904 + $0x28] sm:$0xf]
      %v913 = vld [vmem:[%s904 + $0x8] sm:$0x1]
      %v914 = vld [vmem:[%s904 + $0x14] sm:$0x1]
      %v915 = vld [vmem:[%s904 + $0x20] sm:$0x1]
      %v916 = vld [vmem:[%s904 + $0x2c] sm:$0x1]
      %v917 = vld [vmem:[%s904] sm:$0xe]
      %v918 = vld [vmem:[%s904 + $0xc] sm:$0xe]
      %v919 = vld [vmem:[%s904 + $0x18] sm:$0xe]
      %v920 = vld [vmem:[%s904 + $0x24] sm:$0xe]
      %v929 = vunpack.c.l.b16 %v872
      %v930 = vunpack.c.l.b16 %v873
      %v931 = vunpack.c.l.b16 %v874
      %v932 = vunpack.c.l.b16 %v875
      %v933 = vunpack.c.l.b16 %v876
      %v934 = vunpack.c.l.b16 %v877
      %v935 = vunpack.c.l.b16 %v878
      %v936 = vunpack.c.l.b16 %v879
      %v937 = vpack.c.b16 %v930, %v929
      %v938 = vpack.c.b16 %v932, %v931
      %v939 = vpack.c.b16 %v934, %v933
      %v940 = vpack.c.b16 %v936, %v935
      %v945 = vunpack.c.l.b16 %v880
      %v946 = vunpack.c.l.b16 %v881
      %v947 = vunpack.c.l.b16 %v882
      %v948 = vunpack.c.l.b16 %v883
      %v949 = vpack.c.b16 %v945, %v945
      %v950 = vpack.c.b16 %v946, %v946
      %v951 = vpack.c.b16 %v947, %v947
      %v952 = vpack.c.b16 %v948, %v948
      %vm953 = vsmask.f32 7424
      %v955 = vshrl.u32 %v937, 16
      %v957 = vshll.u32 %v937, 16
      %v959 = vrot.slane %v957, 1
      %v960 = vor.u32 %v955, %v959
      %v962 = vshll.u32 %v949, 16
      %v964 = vrot.slane %v962, 1
      %v965 = vsel %vm953, %v960, %v964
      %v967 = vshrl.u32 %v938, 16
      %v969 = vshll.u32 %v938, 16
      %v971 = vrot.slane %v969, 1
      %v972 = vor.u32 %v967, %v971
      %v974 = vshll.u32 %v950, 16
      %v976 = vrot.slane %v974, 1
      %v977 = vsel %vm953, %v972, %v976
      %v979 = vshrl.u32 %v939, 16
      %v981 = vshll.u32 %v939, 16
      %v983 = vrot.slane %v981, 1
      %v984 = vor.u32 %v979, %v983
      %v986 = vshll.u32 %v951, 16
      %v988 = vrot.slane %v986, 1
      %v989 = vsel %vm953, %v984, %v988
      %v991 = vshrl.u32 %v940, 16
      %v993 = vshll.u32 %v940, 16
      %v995 = vrot.slane %v993, 1
      %v996 = vor.u32 %v991, %v995
      %v998 = vshll.u32 %v952, 16
      %v1000 = vrot.slane %v998, 1
      %v1001 = vsel %vm953, %v996, %v1000
      %1002 = vrot.lane.b32.xlu0 %v965, 4
      %v1003 = vpop.permute.xlu0 %1002
      %1004 = vrot.lane.b32.xlu0 %v977, 4
      %v1005 = vpop.permute.xlu0 %1004
      %1006 = vrot.lane.b32.xlu0 %v989, 4
      %v1007 = vpop.permute.xlu0 %1006
      %1008 = vrot.lane.b32.xlu0 %v1001, 4
      %v1009 = vpop.permute.xlu0 %1008
      %v1014 = vunpack.c.l.b16 %v884
      %v1015 = vunpack.c.l.b16 %v885
      %v1016 = vunpack.c.l.b16 %v886
      %v1017 = vunpack.c.l.b16 %v887
      %v1018 = vpack.c.b16 %v930, %v1014
      %v1019 = vpack.c.b16 %v932, %v1015
      %v1020 = vpack.c.b16 %v934, %v1016
      %v1021 = vpack.c.b16 %v936, %v1017
      %vm1022 = vcmask 1046528
      %v1023 = vrot.slane %v1018, 1
      %v1024 = vrot.slane %v949, 1
      %v1025 = vsel %vm1022, %v1023, %v1024
      %v1026 = vrot.slane %v1019, 1
      %v1027 = vrot.slane %v950, 1
      %v1028 = vsel %vm1022, %v1026, %v1027
      %v1029 = vrot.slane %v1020, 1
      %v1030 = vrot.slane %v951, 1
      %v1031 = vsel %vm1022, %v1029, %v1030
      %v1032 = vrot.slane %v1021, 1
      %v1033 = vrot.slane %v952, 1
      %v1034 = vsel %vm1022, %v1032, %v1033
      %1035 = vrot.lane.b32.xlu0 %v1025, 8
      %v1036 = vpop.permute.xlu0 %1035
      %1037 = vrot.lane.b32.xlu0 %v1028, 8
      %v1038 = vpop.permute.xlu0 %1037
      %1039 = vrot.lane.b32.xlu0 %v1031, 8
      %v1040 = vpop.permute.xlu0 %1039
      %1041 = vrot.lane.b32.xlu0 %v1034, 8
      %v1042 = vpop.permute.xlu0 %1041
      %v1051 = vunpack.c.l.b16 %v888
      %v1052 = vunpack.c.l.b16 %v889
      %v1053 = vunpack.c.l.b16 %v890
      %v1054 = vunpack.c.l.b16 %v891
      %v1055 = vunpack.c.l.b16 %v892
      %v1056 = vunpack.c.l.b16 %v893
      %v1057 = vunpack.c.l.b16 %v894
      %v1058 = vunpack.c.l.b16 %v895
      %v1059 = vpack.c.b16 %v1052, %v1051
      %v1060 = vpack.c.b16 %v1054, %v1053
      %v1061 = vpack.c.b16 %v1056, %v1055
      %v1062 = vpack.c.b16 %v1058, %v1057
      %1063 = vrot.lane.b32.xlu0 %v1059, 12
      %v1064 = vpop.permute.xlu0 %1063
      %1065 = vrot.lane.b32.xlu0 %v1060, 12
      %v1066 = vpop.permute.xlu0 %1065
      %1067 = vrot.lane.b32.xlu0 %v1061, 12
      %v1068 = vpop.permute.xlu0 %1067
      %1069 = vrot.lane.b32.xlu0 %v1062, 12
      %v1070 = vpop.permute.xlu0 %1069
      %v1075 = vunpack.c.l.b16 %v896
      %v1076 = vunpack.c.l.b16 %v897
      %v1077 = vunpack.c.l.b16 %v898
      %v1078 = vunpack.c.l.b16 %v899
      %v1079 = vpack.c.b16 %v1075, %v1075
      %v1080 = vpack.c.b16 %v1076, %v1076
      %v1081 = vpack.c.b16 %v1077, %v1077
      %v1082 = vpack.c.b16 %v1078, %v1078
      %v1084 = vshrl.u32 %v1059, 16
      %v1086 = vshll.u32 %v1059, 16
      %v1088 = vrot.slane %v1086, 1
      %v1089 = vor.u32 %v1084, %v1088
      %v1091 = vshll.u32 %v1079, 16
      %v1093 = vrot.slane %v1091, 1
      %v1094 = vsel %vm953, %v1089, %v1093
      %v1096 = vshrl.u32 %v1060, 16
      %v1098 = vshll.u32 %v1060, 16
      %v1100 = vrot.slane %v1098, 1
      %v1101 = vor.u32 %v1096, %v1100
      %v1103 = vshll.u32 %v1080, 16
      %v1105 = vrot.slane %v1103, 1
      %v1106 = vsel %vm953, %v1101, %v1105
      %v1108 = vshrl.u32 %v1061, 16
      %v1110 = vshll.u32 %v1061, 16
      %v1112 = vrot.slane %v1110, 1
      %v1113 = vor.u32 %v1108, %v1112
      %v1115 = vshll.u32 %v1081, 16
      %v1117 = vrot.slane %v1115, 1
      %v1118 = vsel %vm953, %v1113, %v1117
      %v1120 = vshrl.u32 %v1062, 16
      %v1122 = vshll.u32 %v1062, 16
      %v1124 = vrot.slane %v1122, 1
      %v1125 = vor.u32 %v1120, %v1124
      %v1127 = vshll.u32 %v1082, 16
      %v1129 = vrot.slane %v1127, 1
      %v1130 = vsel %vm953, %v1125, %v1129
      %1131 = vrot.lane.b32.xlu0 %v1094, 16
      %v1132 = vpop.permute.xlu0 %1131
      %1133 = vrot.lane.b32.xlu0 %v1106, 16
      %v1134 = vpop.permute.xlu0 %1133
      %1135 = vrot.lane.b32.xlu0 %v1118, 16
      %v1136 = vpop.permute.xlu0 %1135
      %1137 = vrot.lane.b32.xlu0 %v1130, 16
      %v1138 = vpop.permute.xlu0 %1137
      %v1143 = vunpack.c.l.b16 %v900
      %v1144 = vunpack.c.l.b16 %v901
      %v1145 = vunpack.c.l.b16 %v902
      %v1146 = vunpack.c.l.b16 %v903
      %v1147 = vpack.c.b16 %v1052, %v1143
      %v1148 = vpack.c.b16 %v1054, %v1144
      %v1149 = vpack.c.b16 %v1056, %v1145
      %v1150 = vpack.c.b16 %v1058, %v1146
      %v1151 = vrot.slane %v1147, 1
      %v1152 = vrot.slane %v1079, 1
      %v1153 = vsel %vm1022, %v1151, %v1152
      %v1154 = vrot.slane %v1148, 1
      %v1155 = vrot.slane %v1080, 1
      %v1156 = vsel %vm1022, %v1154, %v1155
      %v1157 = vrot.slane %v1149, 1
      %v1158 = vrot.slane %v1081, 1
      %v1159 = vsel %vm1022, %v1157, %v1158
      %v1160 = vrot.slane %v1150, 1
      %v1161 = vrot.slane %v1082, 1
      %v1162 = vsel %vm1022, %v1160, %v1161
      %1163 = vrot.lane.b32.xlu0 %v1153, 20
      %v1164 = vpop.permute.xlu0 %1163
      %1165 = vrot.lane.b32.xlu0 %v1156, 20
      %v1166 = vpop.permute.xlu0 %1165
      %1167 = vrot.lane.b32.xlu0 %v1159, 20
      %v1168 = vpop.permute.xlu0 %1167
      %1169 = vrot.lane.b32.xlu0 %v1162, 20
      %v1170 = vpop.permute.xlu0 %1169
      %v1179 = vunpack.c.l.b16 %v905
      %v1180 = vunpack.c.l.b16 %v906
      %v1181 = vunpack.c.l.b16 %v907
      %v1182 = vunpack.c.l.b16 %v908
      %v1183 = vunpack.c.l.b16 %v909
      %v1184 = vunpack.c.l.b16 %v910
      %v1185 = vunpack.c.l.b16 %v911
      %v1186 = vunpack.c.l.b16 %v912
      %v1187 = vpack.c.b16 %v1180, %v1179
      %v1188 = vpack.c.b16 %v1182, %v1181
      %v1189 = vpack.c.b16 %v1184, %v1183
      %v1190 = vpack.c.b16 %v1186, %v1185
      %1191 = vrot.lane.b32.xlu0 %v1187, 24
      %v1192 = vpop.permute.xlu0 %1191
      %1193 = vrot.lane.b32.xlu0 %v1188, 24
      %v1194 = vpop.permute.xlu0 %1193
      %1195 = vrot.lane.b32.xlu0 %v1189, 24
      %v1196 = vpop.permute.xlu0 %1195
      %1197 = vrot.lane.b32.xlu0 %v1190, 24
      %v1198 = vpop.permute.xlu0 %1197
      %v1203 = vunpack.c.l.b16 %v913
      %v1204 = vunpack.c.l.b16 %v914
      %v1205 = vunpack.c.l.b16 %v915
      %v1206 = vunpack.c.l.b16 %v916
      %v1207 = vpack.c.b16 %v1203, %v1203
      %v1208 = vpack.c.b16 %v1204, %v1204
      %v1209 = vpack.c.b16 %v1205, %v1205
      %v1210 = vpack.c.b16 %v1206, %v1206
      %v1212 = vshrl.u32 %v1187, 16
      %v1214 = vshll.u32 %v1187, 16
      %v1216 = vrot.slane %v1214, 1
      %v1217 = vor.u32 %v1212, %v1216
      %v1219 = vshll.u32 %v1207, 16
      %v1221 = vrot.slane %v1219, 1
      %v1222 = vsel %vm953, %v1217, %v1221
      %v1224 = vshrl.u32 %v1188, 16
      %v1226 = vshll.u32 %v1188, 16
      %v1228 = vrot.slane %v1226, 1
      %v1229 = vor.u32 %v1224, %v1228
      %v1231 = vshll.u32 %v1208, 16
      %v1233 = vrot.slane %v1231, 1
      %v1234 = vsel %vm953, %v1229, %v1233
      %v1236 = vshrl.u32 %v1189, 16
      %v1238 = vshll.u32 %v1189, 16
      %v1240 = vrot.slane %v1238, 1
      %v1241 = vor.u32 %v1236, %v1240
      %v1243 = vshll.u32 %v1209, 16
      %v1245 = vrot.slane %v1243, 1
      %v1246 = vsel %vm953, %v1241, %v1245
      %v1248 = vshrl.u32 %v1190, 16
      %v1250 = vshll.u32 %v1190, 16
      %v1252 = vrot.slane %v1250, 1
      %v1253 = vor.u32 %v1248, %v1252
      %v1255 = vshll.u32 %v1210, 16
      %v1257 = vrot.slane %v1255, 1
      %v1258 = vsel %vm953, %v1253, %v1257
      %1259 = vrot.lane.b32.xlu0 %v1222, 28
      %v1260 = vpop.permute.xlu0 %1259
      %1261 = vrot.lane.b32.xlu0 %v1234, 28
      %v1262 = vpop.permute.xlu0 %1261
      %1263 = vrot.lane.b32.xlu0 %v1246, 28
      %v1264 = vpop.permute.xlu0 %1263
      %1265 = vrot.lane.b32.xlu0 %v1258, 28
      %v1266 = vpop.permute.xlu0 %1265
      %v1271 = vunpack.c.l.b16 %v917
      %v1272 = vunpack.c.l.b16 %v918
      %v1273 = vunpack.c.l.b16 %v919
      %v1274 = vunpack.c.l.b16 %v920
      %v1275 = vpack.c.b16 %v1180, %v1271
      %v1276 = vpack.c.b16 %v1182, %v1272
      %v1277 = vpack.c.b16 %v1184, %v1273
      %v1278 = vpack.c.b16 %v1186, %v1274
      %v1279 = vrot.slane %v1275, 1
      %v1280 = vrot.slane %v1207, 1
      %v1281 = vsel %vm1022, %v1279, %v1280
      %v1282 = vrot.slane %v1276, 1
      %v1283 = vrot.slane %v1208, 1
      %v1284 = vsel %vm1022, %v1282, %v1283
      %v1285 = vrot.slane %v1277, 1
      %v1286 = vrot.slane %v1209, 1
      %v1287 = vsel %vm1022, %v1285, %v1286
      %v1288 = vrot.slane %v1278, 1
      %v1289 = vrot.slane %v1210, 1
      %v1290 = vsel %vm1022, %v1288, %v1289
      %1291 = vrot.lane.b32.xlu0 %v1281, 32
      %v1292 = vpop.permute.xlu0 %1291
      %1293 = vrot.lane.b32.xlu0 %v1284, 32
      %v1294 = vpop.permute.xlu0 %1293
      %1295 = vrot.lane.b32.xlu0 %v1287, 32
      %v1296 = vpop.permute.xlu0 %1295
      %1297 = vrot.lane.b32.xlu0 %v1290, 32
      %v1298 = vpop.permute.xlu0 %1297
      %vm1299 = vcmask 31744
      %v1301 = vsel %vm1299, %v937, %v1003
      %v1303 = vsel %vm1299, %v938, %v1005
      %v1305 = vsel %vm1299, %v939, %v1007
      %v1307 = vsel %vm1299, %v940, %v1009
      %vm1308 = vcmask 64512
      %v1310 = vsel %vm1308, %v1301, %v1036
      %v1312 = vsel %vm1308, %v1303, %v1038
      %v1314 = vsel %vm1308, %v1305, %v1040
      %v1316 = vsel %vm1308, %v1307, %v1042
      %vm1317 = vcmask 97280
      %v1319 = vsel %vm1317, %v1310, %v1064
      %v1321 = vsel %vm1317, %v1312, %v1066
      %v1323 = vsel %vm1317, %v1314, %v1068
      %v1325 = vsel %vm1317, %v1316, %v1070
      %vm1326 = vcmask 130048
      %v1328 = vsel %vm1326, %v1319, %v1132
      %v1330 = vsel %vm1326, %v1321, %v1134
      %v1332 = vsel %vm1326, %v1323, %v1136
      %v1334 = vsel %vm1326, %v1325, %v1138
      %vm1335 = vcmask 162816
      %v1337 = vsel %vm1335, %v1328, %v1164
      %v1339 = vsel %vm1335, %v1330, %v1166
      %v1341 = vsel %vm1335, %v1332, %v1168
      %v1343 = vsel %vm1335, %v1334, %v1170
      %vm1344 = vcmask 195584
      %v1346 = vsel %vm1344, %v1337, %v1192
      %v1348 = vsel %vm1344, %v1339, %v1194
      %v1350 = vsel %vm1344, %v1341, %v1196
      %v1352 = vsel %vm1344, %v1343, %v1198
      %vm1353 = vcmask 228352
      %v1355 = vsel %vm1353, %v1346, %v1260
      %v1357 = vsel %vm1353, %v1348, %v1262
      %v1359 = vsel %vm1353, %v1350, %v1264
      %v1361 = vsel %vm1353, %v1352, %v1266
      %vm1362 = vcmask 261120
      %v1364 = vsel %vm1362, %v1355, %v1292
      %v1366 = vsel %vm1362, %v1357, %v1294
      %v1368 = vsel %vm1362, %v1359, %v1296
      %v1370 = vsel %vm1362, %v1361, %v1298
      %v1371 = vld [vmem:[%s5] sm:$0xf]
      %v1372 = vld [vmem:[%s5 + $0x4] sm:$0xf]
      %v1373 = vld [vmem:[%s5 + $0x8] sm:$0xf]
      %v1374 = vld [vmem:[%s5 + $0xc] sm:$0xf]
      %v1375 = vld [vmem:[%s5 + $0x10] sm:$0x3]
      %v1381 = vunpack.c.l.b16 %v1371
      %v1382 = vunpack.c.l.b16 %v1372
      %v1383 = vunpack.c.l.b16 %v1373
      %v1384 = vunpack.c.l.b16 %v1374
      %v1385 = vunpack.c.l.b16 %v1375
      %v1386 = vpack.c.b16 %v1382, %v1381
      %v1387 = vpack.c.b16 %v1384, %v1383
      %v1388 = vpack.c.b16 %v1385, %v1385
      %vm1391 = vcmask 293888
      %v1392 = vsel %vm1391, %v1364, 0
      %v1394 = vsel %vm1391, %v1366, 0
      %v1396 = vsel %vm1391, %v1368, 0
      %v1398 = vsel %vm1391, %v1370, 0
      %vm1400 = vcmask 1041408
      %v1402 = vsel %vm1400, %v1388, 0
      %1404 = vmatprep.subr.bf16.mxu0 0
      %1405 = vmatpush1.bf16.msra.mxu0 %v1386
      %1406 = vmatprep.subr.bf16.mxu0 0
      %1407 = vmatpush1.bf16.msra.mxu0 %v1387
      %1408 = vmatprep.subr.bf16.mxu0 0
      %1409 = vmatpush1.bf16.msra.mxu0 %v1402
      %1410 = vmatprep.subr.bf16.mxu0 0
      %1411 = vmatpush1.bf16.msra.mxu0 0
      %1412 = vmatprep.subr.bf16.mxu0 0
      %1413 = vmatpush1.bf16.msra.mxu0 0
      %1414 = vmatprep.subr.bf16.mxu0 0
      %1415 = vmatpush1.bf16.msra.mxu0 0
      %1416 = vmatprep.subr.bf16.mxu0 0
      %1417 = vmatpush1.bf16.msra.mxu0 0
      %1418 = vmatprep.subr.bf16.mxu0 0
      %1419 = vmatpush1.bf16.msra.mxu0 0
      %1420 = vmatprep.subr.bf16.mxu0 0
      %1421 = vmatpush1.bf16.msra.mxu0 0
      %1422 = vmatprep.subr.bf16.mxu0 0
      %1423 = vmatpush1.bf16.msra.mxu0 0
      %1424 = vmatprep.subr.bf16.mxu0 0
      %1425 = vmatpush1.bf16.msra.mxu0 0
      %1426 = vmatprep.subr.bf16.mxu0 0
      %1427 = vmatpush1.bf16.msra.mxu0 0
      %1428 = vmatprep.subr.bf16.mxu0 0
      %1429 = vmatpush1.bf16.msra.mxu0 0
      %1430 = vmatprep.subr.bf16.mxu0 0
      %1431 = vmatpush1.bf16.msra.mxu0 0
      %1432 = vmatprep.subr.bf16.mxu0 0
      %1433 = vmatpush1.bf16.msra.mxu0 0
      %1434 = vmatprep.subr.bf16.mxu0 0
      %1435 = vmatpush1.bf16.msra.mxu0 0
      %1436 = vmatprep.mubr.bf16.mxu0 0
      %1437 = vmatmul.mubr.bf16.gmra.mrb[0].mxu0 %v1392
      %v1438 = vpop.f32.mrb[0].mxu0
      %v1439 = vadd.f32 0.0, %v1438
      %v1440 = vpop.f32.mrb[0].mxu0
      %v1441 = vpop.f32.mrb[0].mxu0
      %v1442 = vadd.f32 0.0, %v1441
      %v1443 = vpop.f32.mrb[0].mxu0
      %1444 = vmatprep.mubr.bf16.mxu0 0
      %1445 = vmatmul.mubr.bf16.gmra.mrb[0].mxu0 %v1394
      %v1446 = vpop.f32.mrb[0].mxu0
      %v1447 = vadd.f32 0.0, %v1446
      %v1448 = vpop.f32.mrb[0].mxu0
      %v1449 = vpop.f32.mrb[0].mxu0
      %v1450 = vadd.f32 0.0, %v1449
      %v1451 = vpop.f32.mrb[0].mxu0
      %1452 = vmatprep.mubr.bf16.mxu0 0
      %1453 = vmatmul.mubr.bf16.gmra.mrb[0].mxu0 %v1396
      %v1454 = vpop.f32.mrb[0].mxu0
      %v1455 = vadd.f32 0.0, %v1454
      %v1456 = vpop.f32.mrb[0].mxu0
      %v1457 = vpop.f32.mrb[0].mxu0
      %v1458 = vadd.f32 0.0, %v1457
      %v1459 = vpop.f32.mrb[0].mxu0
      %1460 = vmatprep.mubr.bf16.mxu0 0
      %1461 = vmatmul.mubr.bf16.gmra.mrb[0].mxu0 %v1398
      %v1462 = vpop.f32.mrb[0].mxu0
      %v1463 = vadd.f32 0.0, %v1462
      %v1464 = vpop.f32.mrb[0].mxu0
      %v1465 = vpop.f32.mrb[0].mxu0
      %v1466 = vadd.f32 0.0, %v1465
      %v1467 = vpop.f32.mrb[0].mxu0
      %1468 = vdwg.mxu0
      %v1469 = vpack.c.bf16 %v1442, %v1439
      %v1470 = vpack.c.bf16 %v1450, %v1447
      %v1471 = vpack.c.bf16 %v1458, %v1455
      %v1472 = vpack.c.bf16 %v1466, %v1463
      %v1477 = vunpack.c.l.b16 %v1469
      %v1478 = vunpack.c.h.b16 %v1469
      %v1479 = vunpack.c.l.b16 %v1470
      %v1480 = vunpack.c.h.b16 %v1470
      %v1481 = vunpack.c.l.b16 %v1471
      %v1482 = vunpack.c.h.b16 %v1471
      %v1483 = vunpack.c.l.b16 %v1472
      %v1484 = vunpack.c.h.b16 %v1472
      %v1485 = vpack.c.b16 %v1477, %v1477
      %v1486 = vpack.c.b16 %v1478, %v1478
      %v1487 = vpack.c.b16 %v1479, %v1479
      %v1488 = vpack.c.b16 %v1480, %v1480
      %v1489 = vpack.c.b16 %v1481, %v1481
      %v1490 = vpack.c.b16 %v1482, %v1482
      %v1491 = vpack.c.b16 %v1483, %v1483
      %v1492 = vpack.c.b16 %v1484, %v1484
      %vm1501 = vcmask 60416
      %1502 = vst.msk [vmem:[%s497] sm:$0xf] %vm1501, %v1485
      %1503 = vst.msk [vmem:[%s497 + $0x4] sm:$0xf] %vm1501, %v1486
      %1504 = vst.msk [vmem:[%s497 + $0x8] sm:$0xf] %vm1501, %v1487
      %1505 = vst.msk [vmem:[%s497 + $0xc] sm:$0xf] %vm1501, %v1488
      %1506 = vst.msk [vmem:[%s497 + $0x10] sm:$0xf] %vm1501, %v1489
      %1507 = vst.msk [vmem:[%s497 + $0x14] sm:$0xf] %vm1501, %v1490
      %1508 = vst.msk [vmem:[%s497 + $0x18] sm:$0xf] %vm1501, %v1491
      %1509 = vst.msk [vmem:[%s497 + $0x1c] sm:$0xf] %vm1501, %v1492
      %v1510 = vsel %vm1308, %v1439, 0.0
      %v1511 = vsel %vm1308, %v1442, 0.0
      %v1512 = vadd.f32 %v1510, %v1511
      %v1513 = vsel %vm1308, %v1447, 0.0
      %v1514 = vadd.f32 %v1512, %v1513
      %v1515 = vsel %vm1308, %v1450, 0.0
      %v1516 = vadd.f32 %v1514, %v1515
      %v1517 = vsel %vm1308, %v1455, 0.0
      %v1518 = vadd.f32 %v1516, %v1517
      %v1519 = vsel %vm1308, %v1458, 0.0
      %v1520 = vadd.f32 %v1518, %v1519
      %v1521 = vsel %vm1308, %v1463, 0.0
      %v1522 = vadd.f32 %v1520, %v1521
      %v1523 = vsel %vm1308, %v1466, 0.0
      %v1524 = vadd.f32 %v1522, %v1523
      %v1525 = vrot.slane %v1524, 4
      %v1526 = vadd.f32 %v1524, %v1525
      %v1527 = vrot.slane %v1526, 2
      %v1528 = vadd.f32 %v1526, %v1527
      %v1529 = vrot.slane %v1528, 1
      %v1530 = vadd.f32 %v1528, %v1529
      %1531 = vst.msk [vmem:[%s506] sm:$0xff] %vm1308, %v1530
      %v1532 = vmul.f32 %v1439, %v1439
      %v1533 = vmul.f32 %v1442, %v1442
      %v1534 = vmul.f32 %v1447, %v1447
      %v1535 = vmul.f32 %v1450, %v1450
      %v1536 = vmul.f32 %v1455, %v1455
      %v1537 = vmul.f32 %v1458, %v1458
      %v1538 = vmul.f32 %v1463, %v1463
      %v1539 = vmul.f32 %v1466, %v1466
      %v1540 = vsel %vm1308, %v1532, 0.0
      %v1541 = vsel %vm1308, %v1533, 0.0
      %v1542 = vadd.f32 %v1540, %v1541
      %v1543 = vsel %vm1308, %v1534, 0.0
      %v1544 = vadd.f32 %v1542, %v1543
      %v1545 = vsel %vm1308, %v1535, 0.0
      %v1546 = vadd.f32 %v1544, %v1545
      %v1547 = vsel %vm1308, %v1536, 0.0
      %v1548 = vadd.f32 %v1546, %v1547
      %v1549 = vsel %vm1308, %v1537, 0.0
      %v1550 = vadd.f32 %v1548, %v1549
      %v1551 = vsel %vm1308, %v1538, 0.0
      %v1552 = vadd.f32 %v1550, %v1551
      %v1553 = vsel %vm1308, %v1539, 0.0
      %v1554 = vadd.f32 %v1552, %v1553
      %v1555 = vrot.slane %v1554, 4
      %v1556 = vadd.f32 %v1554, %v1555
      %v1557 = vrot.slane %v1556, 2
      %v1558 = vadd.f32 %v1556, %v1557
      %v1559 = vrot.slane %v1558, 1
      %v1560 = vadd.f32 %v1558, %v1559
      %1561 = vst.msk [vmem:[%s514] sm:$0xff] %vm1308, %v1560
      %s1562 = smul.u32 4, %s25
      %p1563 = scmp.lt.s32.totalorder %s24, 1
      %s1564 = scalar_select %p1563, %s24, 1
      %p1565 = scmp.lt.s32.totalorder %s1562, 15
      %s1566 = scalar_select %p1565, %s1562, 15
      %s1567 = smul.addr %s1566, 2
      %s1568 = smul.addr %s1564, 32
      %s1569 = sadd.s32 %s1567, %s1568
      %s1570 = smul.addr %s1569, 4
      %s1571 = scalar_lea.vmem %s6, %s1570
      %p1572 = scmp.lt.s32.totalorder %s24, 1
      %s1573 = scalar_select %p1572, %s24, 1
      %p1574 = scmp.lt.s32.totalorder %s25, 3
      %s1575 = scalar_select %p1574, %s25, 3
      %s1576 = smul.addr %s1573, 4
      %s1577 = sadd.s32 %s1575, %s1576
      %s1578 = smul.addr %s1577, 8
      %s1579 = scalar_lea.vmem %s7, %s1578
      %p1580 = scmp.lt.s32.totalorder %s24, 1
      %s1581 = scalar_select %p1580, %s24, 1
      %p1582 = scmp.lt.s32.totalorder %s25, 3
      %s1583 = scalar_select %p1582, %s25, 3
      %s1584 = smul.addr %s1581, 4
      %s1585 = sadd.s32 %s1583, %s1584
      %s1586 = smul.addr %s1585, 8
      %s1587 = scalar_lea.vmem %s8, %s1586
      // Predicated region
      $region45: #{resblock_pallas.4} parent=43 // pred_check
        %p1588 = pneg %p215
      $region46: #{resblock_pallas.4} parent=43 // pred_check_branch
        %1590 = sbr.rel (%p1588) target = $region48
      $region47: #{resblock_pallas.4} parent=43 // pred_region
        %s1591 = smul.u32 4, %s25
      $region48: #{resblock_pallas.4} parent=43 // pred_fallthru
        _
      // Predicated region
      $region49: #{resblock_pallas.4} parent=43 // pred_check
        %p1592 = pneg %p243
      $region50: #{resblock_pallas.4} parent=43 // pred_check_branch
        %1594 = sbr.rel (%p1592) target = $region52
      $region51: #{resblock_pallas.4} parent=43 // pred_region
        _
      $region52: #{resblock_pallas.4} parent=43 // pred_fallthru
        _
      // Predicated region
      $region53: #{resblock_pallas.4} parent=43 // pred_check
        %p1595 = pneg %p271
      $region54: #{resblock_pallas.4} parent=43 // pred_check_branch
        %1597 = sbr.rel (%p1595) target = $region56
      $region55: #{resblock_pallas.4} parent=43 // pred_region
        _
      $region56: #{resblock_pallas.4} parent=43 // pred_fallthru
        _
    $region44: #{resblock_pallas.4} parent=5 // pred_fallthru
      _
    %p1598 = scmp.le.s32.totalorder 2, %s15
    // Predicated region
    $region57: #{resblock_pallas.4} parent=5 // pred_check
      %p1599 = pneg %p1598
    $region58: #{resblock_pallas.4} parent=5 // pred_check_branch
      %1601 = sbr.rel (%p1599) target = $region60
    $region59: #{resblock_pallas.4} parent=5 // pred_region
      %s1602 = ssub.s32 %s15, 2
      // Predicated region
      $region61: #{resblock_pallas.4} parent=59 // pred_check
        %p1603 = pneg %p221
      $region62: #{resblock_pallas.4} parent=59 // pred_check_branch
        %1605 = sbr.rel (%p1603) target = $region64
      $region63: #{resblock_pallas.4} parent=59 // pred_region
        %s1606 = smul.u32 4, %s27
        %p1607 = scmp.lt.s32.totalorder %s26, 1
        %s1608 = scalar_select %p1607, %s26, 1
        %p1609 = scmp.lt.s32.totalorder %s1606, 15
        %s1610 = scalar_select %p1609, %s1606, 15
        %s1611 = smul.addr %s1610, 2
        %s1612 = smul.addr %s1608, 32
        %s1613 = sadd.s32 %s1611, %s1612
        %s1614 = smul.addr %s1613, 4
        %s1615 = scalar_lea.vmem %s6, %s1614
      $region64: #{resblock_pallas.4} parent=59 // pred_fallthru
        _
      // Predicated region
      $region65: #{resblock_pallas.4} parent=59 // pred_check
        %p1616 = pneg %p249
      $region66: #{resblock_pallas.4} parent=59 // pred_check_branch
        %1618 = sbr.rel (%p1616) target = $region68
      $region67: #{resblock_pallas.4} parent=59 // pred_region
        %p1619 = scmp.lt.s32.totalorder %s26, 1
        %s1620 = scalar_select %p1619, %s26, 1
        %p1621 = scmp.lt.s32.totalorder %s27, 3
        %s1622 = scalar_select %p1621, %s27, 3
        %s1623 = smul.addr %s1620, 4
        %s1624 = sadd.s32 %s1622, %s1623
        %s1625 = smul.addr %s1624, 8
        %s1626 = scalar_lea.vmem %s7, %s1625
      $region68: #{resblock_pallas.4} parent=59 // pred_fallthru
        _
      // Predicated region
      $region69: #{resblock_pallas.4} parent=59 // pred_check
        %p1627 = pneg %p277
      $region70: #{resblock_pallas.4} parent=59 // pred_check_branch
        %1629 = sbr.rel (%p1627) target = $region72
      $region71: #{resblock_pallas.4} parent=59 // pred_region
        %p1630 = scmp.lt.s32.totalorder %s26, 1
        %s1631 = scalar_select %p1630, %s26, 1
        %p1632 = scmp.lt.s32.totalorder %s27, 3
        %s1633 = scalar_select %p1632, %s27, 3
        %s1634 = smul.addr %s1631, 4
        %s1635 = sadd.s32 %s1633, %s1634
        %s1636 = smul.addr %s1635, 8
        %s1637 = scalar_lea.vmem %s8, %s1636
      $region72: #{resblock_pallas.4} parent=59 // pred_fallthru
        _
    $region60: #{resblock_pallas.4} parent=5 // pred_fallthru
      _
  $region6: #{resblock_pallas.4} parent=0 // loop_footer
    %s19 = sadd.s32 1, %s15
  $region7: #{resblock_pallas.4} parent=0 // loop_footer_branch
    %14 = sbr.rel target = $region3
  $region8: #{resblock_pallas.4} parent=0 // loop_exit
    _

</llo_original>
